<compile_context>
chip_gen: v6e
topology: v6e:2x2x1
jax: 0.10.0
libtpu: 0.0.40
codegen_flags: <defaults>
</compile_context>

<pallas_src>
import math
import functools

import jax
import jax.numpy as jnp
from jax.experimental import pallas as pl
from jax.experimental.pallas import tpu as pltpu  # noqa: F401  (TPU backend assumed)

# ---------------- hyper-parameters (small, consistent with the module) ------
HIDDEN_SIZE = 64
MULTI_HEAD = 4
HIDDEN_SIZE_HEAD = HIDDEN_SIZE // MULTI_HEAD   # 16
BATCH = 2
SEQ = 8


# ---------------- fused Pallas kernel ----------------------------------------
def _mhatt_fused_kernel(xv_ref, xk_ref, xq_ref, w_ref, b_ref, mbias_ref,
                        atted_ref, att_ref, *, B, Sq, Sk, H, Dh, HID):
    """Whole MHAtt eval forward for one (small) batch, grid=().

    xv/xk: (B*Sk, HID), xq: (B*Sq, HID)            flattened inputs
    w_ref: (HID, 4*HID)  = [Wv^T | Wk^T | Wq^T*scale | Wm^T]
    b_ref: (4, HID)      = [bv ; bk ; bq*scale ; bm]
    mbias_ref: (B, Sk)   additive mask bias (0.0 keep / -1e9 masked)
    atted_ref: (B*Sq, HID)    output (reshaped to (B, Sq, HID) outside)
    att_ref:   (B*Sq, H*Sk)   output (reshaped to (B, H, Sq, Sk) outside)
    """
    nv = B * Sk
    nq = B * Sq

    b_all = b_ref[...]                                            # (4, HID)

    # --- projections: one MXU issue for v/k/q via a stacked LHS -------------
    xcat = jnp.concatenate(
        [xv_ref[...], xk_ref[...], xq_ref[...]], axis=0)          # (2*nv+nq, HID)
    w_proj = w_ref[:, 0:3 * HID]                                  # (HID, 3*HID)
    proj = jnp.dot(xcat, w_proj, preferred_element_type=jnp.float32)

    vproj = proj[0:nv, 0:HID] + b_all[0:1, :]                     # (nv, HID)
    kproj = proj[nv:2 * nv, HID:2 * HID] + b_all[1:2, :]          # (nv, HID)
    qproj = proj[2 * nv:2 * nv + nq, 2 * HID:3 * HID] + b_all[2:3, :]   # (nq, HID)

    mbias = mbias_ref[...]                                        # (B, Sk)

    # --- per-(batch, head) attention, fully unrolled (B*H = 8 tiny tiles) ---
    att_rows = []   # per-batch (Sq, H*Sk)
    out_rows = []   # per-batch (Sq, HID)
    for bi in range(B):
        mb = mbias[bi:bi + 1, :]                                  # (1, Sk)
        att_tiles = []
        out_tiles = []
        for h in range(H):
            qh = qproj[bi * Sq:(bi + 1) * Sq, h * Dh:(h + 1) * Dh]    # (Sq, Dh)
            kh = kproj[bi * Sk:(bi + 1) * Sk, h * Dh:(h + 1) * Dh]    # (Sk, Dh)
            vh = vproj[bi * Sk:(bi + 1) * Sk, h * Dh:(h + 1) * Dh]    # (Sk, Dh)

            # q @ k^T (+ additive mask bias); 1/sqrt(Dh) already folded into Wq/bq.
            # Transposed contraction left to matmul dimension numbers (no
            # materialized sub-tile transpose).
            scores = jax.lax.dot_general(
                qh, kh, (((1,), (1,)), ((), ())),
                preferred_element_type=jnp.float32) + mb              # (Sq, Sk)

            # gamma_att / bam_contexk eval: softmax(log_softmax(s)) == softmax(s).
            # Exact denominator so the returned k_weibull rows sum to 1.
            mmax = jnp.max(scores, axis=-1, keepdims=True)
            e = jnp.exp(scores - mmax)
            att = e / jnp.sum(e, axis=-1, keepdims=True)              # (Sq, Sk)

            att_tiles.append(att)
            out_tiles.append(
                jnp.dot(att, vh, preferred_element_type=jnp.float32))  # (Sq, Dh)

        att_rows.append(jnp.concatenate(att_tiles, axis=1))           # (Sq, H*Sk)
        out_rows.append(jnp.concatenate(out_tiles, axis=1))           # (Sq, HID)

    # Single lane-dense store of the attention maps.
    att_ref[...] = jnp.concatenate(att_rows, axis=0)                  # (B*Sq, H*Sk)

    # linear_merge straight from registers (no VMEM scratch round-trip).
    merged = jnp.concatenate(out_rows, axis=0)                        # (B*Sq, HID)
    w_merge = w_ref[:, 3 * HID:4 * HID]                               # (HID, HID)
    atted_ref[...] = (
        jnp.dot(merged, w_merge, preferred_element_type=jnp.float32)
        + b_all[3:4, :]
    )


# ---------------- params prep (one-time, outside the forward) ---------------
def prepare_params(params):
    """Pre-transpose weights to (Din, Dout), fold 1/sqrt(Dh) into Wq/bq and
    concatenate everything into a single weight and a single bias operand."""
    scale = 1.0 / math.sqrt(HIDDEN_SIZE_HEAD)
    w_all = jnp.concatenate(
        [params["wv"].T, params["wk"].T, params["wq"].T * scale, params["wm"].T],
        axis=1)                                                   # (HID, 4*HID)
    b_all = jnp.stack(
        [params["bv"], params["bk"], params["bq"] * scale, params["bm"]],
        axis=0)                                                   # (4, HID)
    return {"w_all": w_all, "b_all": b_all}


# ---------------- MHAtt forward (bam_contexk, gamma_att, eval) --------------
def mhatt_forward(prep, v, k, q, mask):
    B, Sq, HID = q.shape
    Sk = k.shape[1]
    H, Dh = MULTI_HEAD, HIDDEN_SIZE_HEAD
    assert HID == H * Dh, "hidden size must equal MULTI_HEAD * HIDDEN_SIZE_HEAD"

    xv = v.reshape(B * Sk, HID)
    xk = k.reshape(B * Sk, HID)
    xq = q.reshape(B * Sq, HID)
    # additive mask bias: 0.0 where kept, -1e9 where masked (== masked_fill after softmax)
    mbias = jnp.where(mask.reshape(B, Sk), jnp.float32(-1e9), jnp.float32(0.0))

    kernel = functools.partial(
        _mhatt_fused_kernel, B=B, Sq=Sq, Sk=Sk, H=H, Dh=Dh, HID=HID)

    full = lambda shp: pl.BlockSpec(shp, lambda: (0,) * len(shp))

    atted2d, att2d = pl.pallas_call(
        kernel,
        out_shape=(
            jax.ShapeDtypeStruct((B * Sq, HID), jnp.float32),
            jax.ShapeDtypeStruct((B * Sq, H * Sk), jnp.float32),
        ),
        in_specs=[
            full((B * Sk, HID)),     # xv
            full((B * Sk, HID)),     # xk
            full((B * Sq, HID)),     # xq
            full((HID, 4 * HID)),    # w_all
            full((4, HID)),          # b_all
            full((B, Sk)),           # mask bias
        ],
        out_specs=(
            full((B * Sq, HID)),
            full((B * Sq, H * Sk)),
        ),
    )(xv, xk, xq, prep["w_all"], prep["b_all"], mbias)

    atted = atted2d.reshape(B, Sq, HID)
    # row = b*Sq + q, col = h*Sk + k  ->  (B, H, Sq, Sk)
    k_wei = att2d.reshape(B, Sq, H, Sk).transpose(0, 2, 1, 3)     # k_weibull = att_map (eval)
    return atted, k_wei


# ---------------- pure-JAX reference (for correctness check) ----------------
def mhatt_reference(params, v, k, q, mask):
    b, sq, hd = q.shape
    h, dh = MULTI_HEAD, HIDDEN_SIZE_HEAD
    hp = jax.lax.Precision.HIGHEST   # full-precision f32 reference matmuls

    def lin(x, w, bias):
        return jnp.matmul(x, w.T, precision=hp) + bias

    def split(x):
        return x.reshape(b, -1, h, dh).transpose(0, 2, 1, 3)

    vh = split(lin(v, params["wv"], params["bv"]))
    k1 = split(lin(k, params["wk"], params["bk"]))
    q1 = split(lin(q, params["wq"], params["bq"]))
    scores = jnp.einsum("bhqd,bhkd->bhqk", q1, k1, precision=hp) / math.sqrt(dh)
    scores = jnp.where(mask, -1e9, scores)
    att = jax.nn.softmax(jax.nn.log_softmax(scores, axis=-1), axis=-1)
    atted = jnp.einsum("bhqk,bhkd->bhqd", att, vh, precision=hp)
    atted = atted.transpose(0, 2, 1, 3).reshape(b, sq, hd)
    atted = lin(atted, params["wm"], params["bm"])
    return atted, att


# ---------------- main -------------------------------------------------------
if __name__ == "__main__":
    key = jax.random.PRNGKey(0)
    keys = jax.random.split(key, 16)

    def winit(kk, dout, din):
        return jax.random.normal(kk, (dout, din), jnp.float32) * 0.1

    params = {
        "wv": winit(keys[0], HIDDEN_SIZE, HIDDEN_SIZE),
        "bv": jax.random.normal(keys[1], (HIDDEN_SIZE,), jnp.float32) * 0.01,
        "wk": winit(keys[2], HIDDEN_SIZE, HIDDEN_SIZE),
        "bk": jax.random.normal(keys[3], (HIDDEN_SIZE,), jnp.float32) * 0.01,
        "wq": winit(keys[4], HIDDEN_SIZE, HIDDEN_SIZE),
        "bq": jax.random.normal(keys[5], (HIDDEN_SIZE,), jnp.float32) * 0.01,
        "wm": winit(keys[6], HIDDEN_SIZE, HIDDEN_SIZE),
        "bm": jax.random.normal(keys[7], (HIDDEN_SIZE,), jnp.float32) * 0.01,
    }
    prep = prepare_params(params)   # one-time concat / transpose / scale folding

    v_in = jax.random.normal(keys[8], (BATCH, SEQ, HIDDEN_SIZE), jnp.float32)
    k_in = jax.random.normal(keys[9], (BATCH, SEQ, HIDDEN_SIZE), jnp.float32)
    q_in = jax.random.normal(keys[10], (BATCH, SEQ, HIDDEN_SIZE), jnp.float32)

    # mask: True (1) = masked position; batch 0 keeps all 8, batch 1 keeps 6.
    lens = jnp.array([8, 6], dtype=jnp.int32)
    pos = jnp.arange(SEQ, dtype=jnp.int32)
    mask = (pos[None, :] >= lens[:, None]).reshape(BATCH, 1, 1, SEQ)  # bool

    fwd = jax.jit(mhatt_forward)
    atted, k_wei = fwd(prep, v_in, k_in, q_in, mask)
    atted, k_wei = jax.block_until_ready((atted, k_wei))

    ref_atted, ref_kwei = mhatt_reference(params, v_in, k_in, q_in, mask)

    assert atted.shape == (BATCH, SEQ, HIDDEN_SIZE)
    assert k_wei.shape == (BATCH, MULTI_HEAD, SEQ, SEQ)
    # Tolerance note: under Pallas interpret mode the in-kernel f32 matmuls run as
    # plain XLA dots at DEFAULT (bf16-input) precision on TPU (~5e-3 abs error at
    # these magnitudes); compiled Mosaic f32 matmuls and the HIGHEST-precision
    # reference are much tighter. 1e-2 covers both environments.
    assert jnp.allclose(atted, ref_atted, atol=1e-2, rtol=1e-2), "atted mismatch"
    assert jnp.allclose(k_wei, ref_kwei, atol=1e-2, rtol=1e-2), "k_wei mismatch"

    print("KERNEL_OK")
</pallas_src>

<mosaic_0001>
module attributes {stable_mosaic.version = 11 : i64} {
  func.func @_mhatt_fused_kernel(%arg0: memref<16x64xf32, #tpu.memory_space<vmem>>, %arg1: memref<16x64xf32, #tpu.memory_space<vmem>>, %arg2: memref<16x64xf32, #tpu.memory_space<vmem>>, %arg3: memref<64x256xf32, #tpu.memory_space<vmem>>, %arg4: memref<4x64xf32, #tpu.memory_space<vmem>>, %arg5: memref<2x8xf32, #tpu.memory_space<vmem>>, %arg6: memref<16x64xf32, #tpu.memory_space<vmem>>, %arg7: memref<16x32xf32, #tpu.memory_space<vmem>>) attributes {dimension_semantics = [], scalar_prefetch = 0 : i64, scratch_operands = 0 : i64, tpu.core_type = #tpu.core_type<tc>} {
    %c0 = arith.constant 0 : index
    %c0_0 = arith.constant 0 : index
    %0 = vector.load %arg4[%c0, %c0_0] : memref<4x64xf32, #tpu.memory_space<vmem>>, vector<4x64xf32>
    %c0_1 = arith.constant 0 : index
    %c0_2 = arith.constant 0 : index
    %1 = vector.load %arg0[%c0_1, %c0_2] : memref<16x64xf32, #tpu.memory_space<vmem>>, vector<16x64xf32>
    %c0_3 = arith.constant 0 : index
    %c0_4 = arith.constant 0 : index
    %2 = vector.load %arg1[%c0_3, %c0_4] : memref<16x64xf32, #tpu.memory_space<vmem>>, vector<16x64xf32>
    %c0_5 = arith.constant 0 : index
    %c0_6 = arith.constant 0 : index
    %3 = vector.load %arg2[%c0_5, %c0_6] : memref<16x64xf32, #tpu.memory_space<vmem>>, vector<16x64xf32>
    %4 = tpu.concatenate %1, %2, %3 in 0 : vector<16x64xf32>, vector<16x64xf32>, vector<16x64xf32> -> vector<48x64xf32>
    %c0_7 = arith.constant 0 : index
    %c0_8 = arith.constant 0 : index
    %5 = vector.load %arg3[%c0_7, %c0_8] : memref<64x256xf32, #tpu.memory_space<vmem>>, vector<64x192xf32>
    %cst = arith.constant dense<0.000000e+00> : vector<48x192xf32>
    %6 = tpu.matmul %4, %5, %cst {dimension_numbers = #tpu.dot_dimension_numbers<[1], [0], [0], [1], [0, 0, 1, 1], [], []>} : vector<48x64xf32>, vector<64x192xf32>, vector<48x192xf32> -> vector<48x192xf32>
    %7 = vector.extract_strided_slice %6 {offsets = [0, 0], sizes = [16, 64], strides = [1, 1]} : vector<48x192xf32> to vector<16x64xf32>
    %8 = vector.extract_strided_slice %0 {offsets = [0, 0], sizes = [1, 64], strides = [1, 1]} : vector<4x64xf32> to vector<1x64xf32>
    %9 = vector.broadcast %8 : vector<1x64xf32> to vector<16x64xf32>
    %10 = arith.addf %7, %9 : vector<16x64xf32>
    %11 = vector.extract_strided_slice %6 {offsets = [16, 64], sizes = [16, 64], strides = [1, 1]} : vector<48x192xf32> to vector<16x64xf32>
    %12 = vector.extract_strided_slice %0 {offsets = [1, 0], sizes = [1, 64], strides = [1, 1]} : vector<4x64xf32> to vector<1x64xf32>
    %13 = vector.broadcast %12 : vector<1x64xf32> to vector<16x64xf32>
    %14 = arith.addf %11, %13 : vector<16x64xf32>
    %15 = vector.extract_strided_slice %6 {offsets = [32, 128], sizes = [16, 64], strides = [1, 1]} : vector<48x192xf32> to vector<16x64xf32>
    %16 = vector.extract_strided_slice %0 {offsets = [2, 0], sizes = [1, 64], strides = [1, 1]} : vector<4x64xf32> to vector<1x64xf32>
    %17 = vector.broadcast %16 : vector<1x64xf32> to vector<16x64xf32>
    %18 = arith.addf %15, %17 : vector<16x64xf32>
    %c0_9 = arith.constant 0 : index
    %c0_10 = arith.constant 0 : index
    %19 = vector.load %arg5[%c0_9, %c0_10] : memref<2x8xf32, #tpu.memory_space<vmem>>, vector<2x8xf32>
    %20 = vector.extract_strided_slice %19 {offsets = [0, 0], sizes = [1, 8], strides = [1, 1]} : vector<2x8xf32> to vector<1x8xf32>
    %21 = vector.extract_strided_slice %18 {offsets = [0, 0], sizes = [8, 16], strides = [1, 1]} : vector<16x64xf32> to vector<8x16xf32>
    %22 = vector.extract_strided_slice %14 {offsets = [0, 0], sizes = [8, 16], strides = [1, 1]} : vector<16x64xf32> to vector<8x16xf32>
    %23 = vector.extract_strided_slice %10 {offsets = [0, 0], sizes = [8, 16], strides = [1, 1]} : vector<16x64xf32> to vector<8x16xf32>
    %cst_11 = arith.constant dense<0.000000e+00> : vector<8x8xf32>
    %24 = tpu.matmul %21, %22, %cst_11 {dimension_numbers = #tpu.dot_dimension_numbers<[1], [1], [0], [0], [0, 0, 1, 0], [], []>} : vector<8x16xf32>, vector<8x16xf32>, vector<8x8xf32> -> vector<8x8xf32>
    %25 = vector.broadcast %20 : vector<1x8xf32> to vector<8x8xf32>
    %26 = arith.addf %24, %25 : vector<8x8xf32>
    %cst_12 = arith.constant dense<0xFF800000> : vector<8xf32>
    %27 = vector.multi_reduction <maximumf>, %26, %cst_12 [1] : vector<8x8xf32> to vector<8xf32>
    %28 = vector.shape_cast %27 : vector<8xf32> to vector<8x1xf32>
    %29 = vector.broadcast %28 : vector<8x1xf32> to vector<8x8xf32>
    %30 = arith.subf %26, %29 : vector<8x8xf32>
    %31 = math.exp %30 : vector<8x8xf32>
    %cst_13 = arith.constant dense<0.000000e+00> : vector<8xf32>
    %32 = vector.multi_reduction <add>, %31, %cst_13 [1] : vector<8x8xf32> to vector<8xf32>
    %33 = vector.shape_cast %32 : vector<8xf32> to vector<8x1xf32>
    %34 = vector.broadcast %33 : vector<8x1xf32> to vector<8x8xf32>
    %35 = arith.divf %31, %34 : vector<8x8xf32>
    %cst_14 = arith.constant dense<0.000000e+00> : vector<8x16xf32>
    %36 = tpu.matmul %35, %23, %cst_14 {dimension_numbers = #tpu.dot_dimension_numbers<[1], [0], [0], [1], [0, 0, 1, 1], [], []>} : vector<8x8xf32>, vector<8x16xf32>, vector<8x16xf32> -> vector<8x16xf32>
    %37 = vector.extract_strided_slice %18 {offsets = [0, 16], sizes = [8, 16], strides = [1, 1]} : vector<16x64xf32> to vector<8x16xf32>
    %38 = vector.extract_strided_slice %14 {offsets = [0, 16], sizes = [8, 16], strides = [1, 1]} : vector<16x64xf32> to vector<8x16xf32>
    %39 = vector.extract_strided_slice %10 {offsets = [0, 16], sizes = [8, 16], strides = [1, 1]} : vector<16x64xf32> to vector<8x16xf32>
    %cst_15 = arith.constant dense<0.000000e+00> : vector<8x8xf32>
    %40 = tpu.matmul %37, %38, %cst_15 {dimension_numbers = #tpu.dot_dimension_numbers<[1], [1], [0], [0], [0, 0, 1, 0], [], []>} : vector<8x16xf32>, vector<8x16xf32>, vector<8x8xf32> -> vector<8x8xf32>
    %41 = vector.broadcast %20 : vector<1x8xf32> to vector<8x8xf32>
    %42 = arith.addf %40, %41 : vector<8x8xf32>
    %cst_16 = arith.constant dense<0xFF800000> : vector<8xf32>
    %43 = vector.multi_reduction <maximumf>, %42, %cst_16 [1] : vector<8x8xf32> to vector<8xf32>
    %44 = vector.shape_cast %43 : vector<8xf32> to vector<8x1xf32>
    %45 = vector.broadcast %44 : vector<8x1xf32> to vector<8x8xf32>
    %46 = arith.subf %42, %45 : vector<8x8xf32>
    %47 = math.exp %46 : vector<8x8xf32>
    %cst_17 = arith.constant dense<0.000000e+00> : vector<8xf32>
    %48 = vector.multi_reduction <add>, %47, %cst_17 [1] : vector<8x8xf32> to vector<8xf32>
    %49 = vector.shape_cast %48 : vector<8xf32> to vector<8x1xf32>
    %50 = vector.broadcast %49 : vector<8x1xf32> to vector<8x8xf32>
    %51 = arith.divf %47, %50 : vector<8x8xf32>
    %cst_18 = arith.constant dense<0.000000e+00> : vector<8x16xf32>
    %52 = tpu.matmul %51, %39, %cst_18 {dimension_numbers = #tpu.dot_dimension_numbers<[1], [0], [0], [1], [0, 0, 1, 1], [], []>} : vector<8x8xf32>, vector<8x16xf32>, vector<8x16xf32> -> vector<8x16xf32>
    %53 = vector.extract_strided_slice %18 {offsets = [0, 32], sizes = [8, 16], strides = [1, 1]} : vector<16x64xf32> to vector<8x16xf32>
    %54 = vector.extract_strided_slice %14 {offsets = [0, 32], sizes = [8, 16], strides = [1, 1]} : vector<16x64xf32> to vector<8x16xf32>
    %55 = vector.extract_strided_slice %10 {offsets = [0, 32], sizes = [8, 16], strides = [1, 1]} : vector<16x64xf32> to vector<8x16xf32>
    %cst_19 = arith.constant dense<0.000000e+00> : vector<8x8xf32>
    %56 = tpu.matmul %53, %54, %cst_19 {dimension_numbers = #tpu.dot_dimension_numbers<[1], [1], [0], [0], [0, 0, 1, 0], [], []>} : vector<8x16xf32>, vector<8x16xf32>, vector<8x8xf32> -> vector<8x8xf32>
    %57 = vector.broadcast %20 : vector<1x8xf32> to vector<8x8xf32>
    %58 = arith.addf %56, %57 : vector<8x8xf32>
    %cst_20 = arith.constant dense<0xFF800000> : vector<8xf32>
    %59 = vector.multi_reduction <maximumf>, %58, %cst_20 [1] : vector<8x8xf32> to vector<8xf32>
    %60 = vector.shape_cast %59 : vector<8xf32> to vector<8x1xf32>
    %61 = vector.broadcast %60 : vector<8x1xf32> to vector<8x8xf32>
    %62 = arith.subf %58, %61 : vector<8x8xf32>
    %63 = math.exp %62 : vector<8x8xf32>
    %cst_21 = arith.constant dense<0.000000e+00> : vector<8xf32>
    %64 = vector.multi_reduction <add>, %63, %cst_21 [1] : vector<8x8xf32> to vector<8xf32>
    %65 = vector.shape_cast %64 : vector<8xf32> to vector<8x1xf32>
    %66 = vector.broadcast %65 : vector<8x1xf32> to vector<8x8xf32>
    %67 = arith.divf %63, %66 : vector<8x8xf32>
    %cst_22 = arith.constant dense<0.000000e+00> : vector<8x16xf32>
    %68 = tpu.matmul %67, %55, %cst_22 {dimension_numbers = #tpu.dot_dimension_numbers<[1], [0], [0], [1], [0, 0, 1, 1], [], []>} : vector<8x8xf32>, vector<8x16xf32>, vector<8x16xf32> -> vector<8x16xf32>
    %69 = vector.extract_strided_slice %18 {offsets = [0, 48], sizes = [8, 16], strides = [1, 1]} : vector<16x64xf32> to vector<8x16xf32>
    %70 = vector.extract_strided_slice %14 {offsets = [0, 48], sizes = [8, 16], strides = [1, 1]} : vector<16x64xf32> to vector<8x16xf32>
    %71 = vector.extract_strided_slice %10 {offsets = [0, 48], sizes = [8, 16], strides = [1, 1]} : vector<16x64xf32> to vector<8x16xf32>
    %cst_23 = arith.constant dense<0.000000e+00> : vector<8x8xf32>
    %72 = tpu.matmul %69, %70, %cst_23 {dimension_numbers = #tpu.dot_dimension_numbers<[1], [1], [0], [0], [0, 0, 1, 0], [], []>} : vector<8x16xf32>, vector<8x16xf32>, vector<8x8xf32> -> vector<8x8xf32>
    %73 = vector.broadcast %20 : vector<1x8xf32> to vector<8x8xf32>
    %74 = arith.addf %72, %73 : vector<8x8xf32>
    %cst_24 = arith.constant dense<0xFF800000> : vector<8xf32>
    %75 = vector.multi_reduction <maximumf>, %74, %cst_24 [1] : vector<8x8xf32> to vector<8xf32>
    %76 = vector.shape_cast %75 : vector<8xf32> to vector<8x1xf32>
    %77 = vector.broadcast %76 : vector<8x1xf32> to vector<8x8xf32>
    %78 = arith.subf %74, %77 : vector<8x8xf32>
    %79 = math.exp %78 : vector<8x8xf32>
    %cst_25 = arith.constant dense<0.000000e+00> : vector<8xf32>
    %80 = vector.multi_reduction <add>, %79, %cst_25 [1] : vector<8x8xf32> to vector<8xf32>
    %81 = vector.shape_cast %80 : vector<8xf32> to vector<8x1xf32>
    %82 = vector.broadcast %81 : vector<8x1xf32> to vector<8x8xf32>
    %83 = arith.divf %79, %82 : vector<8x8xf32>
    %cst_26 = arith.constant dense<0.000000e+00> : vector<8x16xf32>
    %84 = tpu.matmul %83, %71, %cst_26 {dimension_numbers = #tpu.dot_dimension_numbers<[1], [0], [0], [1], [0, 0, 1, 1], [], []>} : vector<8x8xf32>, vector<8x16xf32>, vector<8x16xf32> -> vector<8x16xf32>
    %85 = tpu.concatenate %35, %51, %67, %83 in 1 : vector<8x8xf32>, vector<8x8xf32>, vector<8x8xf32>, vector<8x8xf32> -> vector<8x32xf32>
    %86 = tpu.concatenate %36, %52, %68, %84 in 1 : vector<8x16xf32>, vector<8x16xf32>, vector<8x16xf32>, vector<8x16xf32> -> vector<8x64xf32>
    %87 = vector.extract_strided_slice %19 {offsets = [1, 0], sizes = [1, 8], strides = [1, 1]} : vector<2x8xf32> to vector<1x8xf32>
    %88 = vector.extract_strided_slice %18 {offsets = [8, 0], sizes = [8, 16], strides = [1, 1]} : vector<16x64xf32> to vector<8x16xf32>
    %89 = vector.extract_strided_slice %14 {offsets = [8, 0], sizes = [8, 16], strides = [1, 1]} : vector<16x64xf32> to vector<8x16xf32>
    %90 = vector.extract_strided_slice %10 {offsets = [8, 0], sizes = [8, 16], strides = [1, 1]} : vector<16x64xf32> to vector<8x16xf32>
    %cst_27 = arith.constant dense<0.000000e+00> : vector<8x8xf32>
    %91 = tpu.matmul %88, %89, %cst_27 {dimension_numbers = #tpu.dot_dimension_numbers<[1], [1], [0], [0], [0, 0, 1, 0], [], []>} : vector<8x16xf32>, vector<8x16xf32>, vector<8x8xf32> -> vector<8x8xf32>
    %92 = vector.broadcast %87 : vector<1x8xf32> to vector<8x8xf32>
    %93 = arith.addf %91, %92 : vector<8x8xf32>
    %cst_28 = arith.constant dense<0xFF800000> : vector<8xf32>
    %94 = vector.multi_reduction <maximumf>, %93, %cst_28 [1] : vector<8x8xf32> to vector<8xf32>
    %95 = vector.shape_cast %94 : vector<8xf32> to vector<8x1xf32>
    %96 = vector.broadcast %95 : vector<8x1xf32> to vector<8x8xf32>
    %97 = arith.subf %93, %96 : vector<8x8xf32>
    %98 = math.exp %97 : vector<8x8xf32>
    %cst_29 = arith.constant dense<0.000000e+00> : vector<8xf32>
    %99 = vector.multi_reduction <add>, %98, %cst_29 [1] : vector<8x8xf32> to vector<8xf32>
    %100 = vector.shape_cast %99 : vector<8xf32> to vector<8x1xf32>
    %101 = vector.broadcast %100 : vector<8x1xf32> to vector<8x8xf32>
    %102 = arith.divf %98, %101 : vector<8x8xf32>
    %cst_30 = arith.constant dense<0.000000e+00> : vector<8x16xf32>
    %103 = tpu.matmul %102, %90, %cst_30 {dimension_numbers = #tpu.dot_dimension_numbers<[1], [0], [0], [1], [0, 0, 1, 1], [], []>} : vector<8x8xf32>, vector<8x16xf32>, vector<8x16xf32> -> vector<8x16xf32>
    %104 = vector.extract_strided_slice %18 {offsets = [8, 16], sizes = [8, 16], strides = [1, 1]} : vector<16x64xf32> to vector<8x16xf32>
    %105 = vector.extract_strided_slice %14 {offsets = [8, 16], sizes = [8, 16], strides = [1, 1]} : vector<16x64xf32> to vector<8x16xf32>
    %106 = vector.extract_strided_slice %10 {offsets = [8, 16], sizes = [8, 16], strides = [1, 1]} : vector<16x64xf32> to vector<8x16xf32>
    %cst_31 = arith.constant dense<0.000000e+00> : vector<8x8xf32>
    %107 = tpu.matmul %104, %105, %cst_31 {dimension_numbers = #tpu.dot_dimension_numbers<[1], [1], [0], [0], [0, 0, 1, 0], [], []>} : vector<8x16xf32>, vector<8x16xf32>, vector<8x8xf32> -> vector<8x8xf32>
    %108 = vector.broadcast %87 : vector<1x8xf32> to vector<8x8xf32>
    %109 = arith.addf %107, %108 : vector<8x8xf32>
    %cst_32 = arith.constant dense<0xFF800000> : vector<8xf32>
    %110 = vector.multi_reduction <maximumf>, %109, %cst_32 [1] : vector<8x8xf32> to vector<8xf32>
    %111 = vector.shape_cast %110 : vector<8xf32> to vector<8x1xf32>
    %112 = vector.broadcast %111 : vector<8x1xf32> to vector<8x8xf32>
    %113 = arith.subf %109, %112 : vector<8x8xf32>
    %114 = math.exp %113 : vector<8x8xf32>
    %cst_33 = arith.constant dense<0.000000e+00> : vector<8xf32>
    %115 = vector.multi_reduction <add>, %114, %cst_33 [1] : vector<8x8xf32> to vector<8xf32>
    %116 = vector.shape_cast %115 : vector<8xf32> to vector<8x1xf32>
    %117 = vector.broadcast %116 : vector<8x1xf32> to vector<8x8xf32>
    %118 = arith.divf %114, %117 : vector<8x8xf32>
    %cst_34 = arith.constant dense<0.000000e+00> : vector<8x16xf32>
    %119 = tpu.matmul %118, %106, %cst_34 {dimension_numbers = #tpu.dot_dimension_numbers<[1], [0], [0], [1], [0, 0, 1, 1], [], []>} : vector<8x8xf32>, vector<8x16xf32>, vector<8x16xf32> -> vector<8x16xf32>
    %120 = vector.extract_strided_slice %18 {offsets = [8, 32], sizes = [8, 16], strides = [1, 1]} : vector<16x64xf32> to vector<8x16xf32>
    %121 = vector.extract_strided_slice %14 {offsets = [8, 32], sizes = [8, 16], strides = [1, 1]} : vector<16x64xf32> to vector<8x16xf32>
    %122 = vector.extract_strided_slice %10 {offsets = [8, 32], sizes = [8, 16], strides = [1, 1]} : vector<16x64xf32> to vector<8x16xf32>
    %cst_35 = arith.constant dense<0.000000e+00> : vector<8x8xf32>
    %123 = tpu.matmul %120, %121, %cst_35 {dimension_numbers = #tpu.dot_dimension_numbers<[1], [1], [0], [0], [0, 0, 1, 0], [], []>} : vector<8x16xf32>, vector<8x16xf32>, vector<8x8xf32> -> vector<8x8xf32>
    %124 = vector.broadcast %87 : vector<1x8xf32> to vector<8x8xf32>
    %125 = arith.addf %123, %124 : vector<8x8xf32>
    %cst_36 = arith.constant dense<0xFF800000> : vector<8xf32>
    %126 = vector.multi_reduction <maximumf>, %125, %cst_36 [1] : vector<8x8xf32> to vector<8xf32>
    %127 = vector.shape_cast %126 : vector<8xf32> to vector<8x1xf32>
    %128 = vector.broadcast %127 : vector<8x1xf32> to vector<8x8xf32>
    %129 = arith.subf %125, %128 : vector<8x8xf32>
    %130 = math.exp %129 : vector<8x8xf32>
    %cst_37 = arith.constant dense<0.000000e+00> : vector<8xf32>
    %131 = vector.multi_reduction <add>, %130, %cst_37 [1] : vector<8x8xf32> to vector<8xf32>
    %132 = vector.shape_cast %131 : vector<8xf32> to vector<8x1xf32>
    %133 = vector.broadcast %132 : vector<8x1xf32> to vector<8x8xf32>
    %134 = arith.divf %130, %133 : vector<8x8xf32>
    %cst_38 = arith.constant dense<0.000000e+00> : vector<8x16xf32>
    %135 = tpu.matmul %134, %122, %cst_38 {dimension_numbers = #tpu.dot_dimension_numbers<[1], [0], [0], [1], [0, 0, 1, 1], [], []>} : vector<8x8xf32>, vector<8x16xf32>, vector<8x16xf32> -> vector<8x16xf32>
    %136 = vector.extract_strided_slice %18 {offsets = [8, 48], sizes = [8, 16], strides = [1, 1]} : vector<16x64xf32> to vector<8x16xf32>
    %137 = vector.extract_strided_slice %14 {offsets = [8, 48], sizes = [8, 16], strides = [1, 1]} : vector<16x64xf32> to vector<8x16xf32>
    %138 = vector.extract_strided_slice %10 {offsets = [8, 48], sizes = [8, 16], strides = [1, 1]} : vector<16x64xf32> to vector<8x16xf32>
    %cst_39 = arith.constant dense<0.000000e+00> : vector<8x8xf32>
    %139 = tpu.matmul %136, %137, %cst_39 {dimension_numbers = #tpu.dot_dimension_numbers<[1], [1], [0], [0], [0, 0, 1, 0], [], []>} : vector<8x16xf32>, vector<8x16xf32>, vector<8x8xf32> -> vector<8x8xf32>
    %140 = vector.broadcast %87 : vector<1x8xf32> to vector<8x8xf32>
    %141 = arith.addf %139, %140 : vector<8x8xf32>
    %cst_40 = arith.constant dense<0xFF800000> : vector<8xf32>
    %142 = vector.multi_reduction <maximumf>, %141, %cst_40 [1] : vector<8x8xf32> to vector<8xf32>
    %143 = vector.shape_cast %142 : vector<8xf32> to vector<8x1xf32>
    %144 = vector.broadcast %143 : vector<8x1xf32> to vector<8x8xf32>
    %145 = arith.subf %141, %144 : vector<8x8xf32>
    %146 = math.exp %145 : vector<8x8xf32>
    %cst_41 = arith.constant dense<0.000000e+00> : vector<8xf32>
    %147 = vector.multi_reduction <add>, %146, %cst_41 [1] : vector<8x8xf32> to vector<8xf32>
    %148 = vector.shape_cast %147 : vector<8xf32> to vector<8x1xf32>
    %149 = vector.broadcast %148 : vector<8x1xf32> to vector<8x8xf32>
    %150 = arith.divf %146, %149 : vector<8x8xf32>
    %cst_42 = arith.constant dense<0.000000e+00> : vector<8x16xf32>
    %151 = tpu.matmul %150, %138, %cst_42 {dimension_numbers = #tpu.dot_dimension_numbers<[1], [0], [0], [1], [0, 0, 1, 1], [], []>} : vector<8x8xf32>, vector<8x16xf32>, vector<8x16xf32> -> vector<8x16xf32>
    %152 = tpu.concatenate %102, %118, %134, %150 in 1 : vector<8x8xf32>, vector<8x8xf32>, vector<8x8xf32>, vector<8x8xf32> -> vector<8x32xf32>
    %153 = tpu.concatenate %103, %119, %135, %151 in 1 : vector<8x16xf32>, vector<8x16xf32>, vector<8x16xf32>, vector<8x16xf32> -> vector<8x64xf32>
    %154 = tpu.concatenate %85, %152 in 0 : vector<8x32xf32>, vector<8x32xf32> -> vector<16x32xf32>
    %c0_43 = arith.constant 0 : index
    %c0_44 = arith.constant 0 : index
    %155 = vector.load %arg7[%c0_43, %c0_44] : memref<16x32xf32, #tpu.memory_space<vmem>>, vector<16x32xf32>
    tpu.vector_store %arg7[%c0_43, %c0_44], %154 {strides = array<i32>} : memref<16x32xf32, #tpu.memory_space<vmem>>, vector<16x32xf32>,
    %156 = tpu.concatenate %86, %153 in 0 : vector<8x64xf32>, vector<8x64xf32> -> vector<16x64xf32>
    %c0_45 = arith.constant 0 : index
    %c192 = arith.constant 192 : index
    %157 = vector.load %arg3[%c0_45, %c192] : memref<64x256xf32, #tpu.memory_space<vmem>>, vector<64x64xf32>
    %cst_46 = arith.constant dense<0.000000e+00> : vector<16x64xf32>
    %158 = tpu.matmul %156, %157, %cst_46 {dimension_numbers = #tpu.dot_dimension_numbers<[1], [0], [0], [1], [0, 0, 1, 1], [], []>} : vector<16x64xf32>, vector<64x64xf32>, vector<16x64xf32> -> vector<16x64xf32>
    %159 = vector.extract_strided_slice %0 {offsets = [3, 0], sizes = [1, 64], strides = [1, 1]} : vector<4x64xf32> to vector<1x64xf32>
    %160 = vector.broadcast %159 : vector<1x64xf32> to vector<16x64xf32>
    %161 = arith.addf %158, %160 : vector<16x64xf32>
    %c0_47 = arith.constant 0 : index
    %c0_48 = arith.constant 0 : index
    %162 = vector.load %arg6[%c0_47, %c0_48] : memref<16x64xf32, #tpu.memory_space<vmem>>, vector<16x64xf32>
    tpu.vector_store %arg6[%c0_47, %c0_48], %161 {strides = array<i32>} : memref<16x64xf32, #tpu.memory_space<vmem>>, vector<16x64xf32>,
    return
  }
}

</mosaic_0001>

<llo_original>
// kernel: mhatt_forward.1
$region0: #{mhatt_forward.1}
  #allocation0 [shape = 'u32[]', space=smem, size = 0x4, offset = 0x4, fixed_abs, tag = 'smem constant byte address 0x4 - core index']
  #allocation1 [shape = 'u32[144,128]{1,0:T(1,128)}', space=vmem, size = 0x12000, scoped, tag = 'internal scratch']
  %s0 = inlined_call_operand.hbm [shape: f32[16,64], index: 0, kind: input, shape index: {}]
  %s1 = inlined_call_operand.hbm [shape: f32[16,64], index: 1, kind: input, shape index: {}]
  %s2 = inlined_call_operand.hbm [shape: f32[16,64], index: 2, kind: input, shape index: {}]
  %s3 = inlined_call_operand.hbm [shape: f32[64,256], index: 3, kind: input, shape index: {}]
  %s4 = inlined_call_operand.vmem [shape: f32[4,64], index: 4, kind: input, shape index: {}]
  %s5 = inlined_call_operand.vmem [shape: f32[2,8], index: 5, kind: input, shape index: {}]
  %s6 = inlined_call_operand.hbm [shape: f32[16,64], index: 6, kind: output, shape index: {0}]
  %s7 = inlined_call_operand.vmem [shape: f32[16,32], index: 7, kind: output, shape index: {1}]
  %8 = xla_tuple %s6, %s7
  %s9 = sld [smem:[#allocation0]]
  $region58: #{mhatt_forward.1} parent=0
    _
  %s11 = ssub.s32 1, %s9
  %s12 = scalar_select 0, %s11, %s9
  $region1: #{mhatt_forward.1} parent=0
    #allocation2 [shape = 'u8[8192]{0}', space=vmem, size = 0x2000, scoped, tag = 'input window, operand 0, single buffered']
    #allocation3 [shape = 's32[1]{0}', space=sflag, size = 0x4, scoped, tag = 'scoped memory for mhatt_forward.1']
    #allocation4 [shape = 's32[1]{0}', space=sflag, size = 0x4, scoped, tag = 'scoped memory for mhatt_forward.1']
    #allocation5 [shape = 'u8[8192]{0}', space=vmem, size = 0x2000, scoped, tag = 'input window, operand 1, single buffered']
    #allocation6 [shape = 's32[1]{0}', space=sflag, size = 0x4, scoped, tag = 'scoped memory for mhatt_forward.1']
    #allocation7 [shape = 'u8[8192]{0}', space=vmem, size = 0x2000, scoped, tag = 'input window, operand 2, single buffered']
    #allocation8 [shape = 'u8[65536]{0}', space=vmem, size = 0x10000, scoped, tag = 'input window, operand 3, single buffered']
    #allocation9 [shape = 's32[1]{0}', space=sflag, size = 0x4, scoped, tag = 'scoped memory for mhatt_forward.1']
    #allocation10 [shape = 'u8[8192]{0}', space=vmem, size = 0x2000, scoped, tag = 'output window, operand 0, single buffered']
    %13 = vsyncpa [#allocation3], 0
    %14 = vsyncpa [#allocation6], 0
    %15 = vsyncpa [#allocation9], 0
    %16 = vsyncpa [#allocation4], 0
    // Predicated region
    $region2: #{mhatt_forward.1} parent=1 // pred_check
      _
    $region3: #{mhatt_forward.1} parent=1 // pred_check_branch
      %18 = sbr.rel (0) target = $region5
    $region4: #{mhatt_forward.1} parent=1 // pred_region
      %s20 = ssub.s32 256, 256
      %21 = vsyncadd [#allocation3], %s20
      %s22 = sshll.u32 [#allocation2], 4
      %s23 = int_to_ptr.vmem [resolvable:$true] %s22
      %28 = dma.hbm_to_vmem [thread:$0]  %s0, 256, %s23, [#allocation3], 128, 128, 8
    $region5: #{mhatt_forward.1} parent=1 // pred_fallthru
      _
    // Predicated region
    $region6: #{mhatt_forward.1} parent=1 // pred_check
      _
    $region7: #{mhatt_forward.1} parent=1 // pred_check_branch
      %30 = sbr.rel (0) target = $region9
    $region8: #{mhatt_forward.1} parent=1 // pred_region
      %s32 = ssub.s32 256, 256
      %33 = vsyncadd [#allocation6], %s32
      %s34 = sshll.u32 [#allocation5], 4
      %s35 = int_to_ptr.vmem [resolvable:$true] %s34
      %40 = dma.hbm_to_vmem [thread:$0]  %s1, 256, %s35, [#allocation6], 128, 128, 8
    $region9: #{mhatt_forward.1} parent=1 // pred_fallthru
      _
    // Predicated region
    $region10: #{mhatt_forward.1} parent=1 // pred_check
      _
    $region11: #{mhatt_forward.1} parent=1 // pred_check_branch
      %42 = sbr.rel (0) target = $region13
    $region12: #{mhatt_forward.1} parent=1 // pred_region
      %s44 = ssub.s32 256, 256
      %45 = vsyncadd [#allocation6], %s44
      %s46 = sshll.u32 [#allocation7], 4
      %s47 = int_to_ptr.vmem [resolvable:$true] %s46
      %52 = dma.hbm_to_vmem [thread:$0]  %s2, 256, %s47, [#allocation6], 128, 128, 8
    $region13: #{mhatt_forward.1} parent=1 // pred_fallthru
      _
    // Predicated region
    $region14: #{mhatt_forward.1} parent=1 // pred_check
      _
    $region15: #{mhatt_forward.1} parent=1 // pred_check_branch
      %54 = sbr.rel (0) target = $region17
    $region16: #{mhatt_forward.1} parent=1 // pred_region
      %s56 = ssub.s32 2048, 2048
      %57 = vsyncadd [#allocation9], %s56
      %s58 = sshll.u32 [#allocation8], 4
      %s59 = int_to_ptr.vmem [resolvable:$true] %s58
      %64 = dma.hbm_to_vmem [thread:$0]  %s3, 2048, %s59, [#allocation9], 256, 256, 16
    $region17: #{mhatt_forward.1} parent=1 // pred_fallthru
      _
    // Predicated region
    $region18: #{mhatt_forward.1} parent=1 // pred_check
      _
    $region19: #{mhatt_forward.1} parent=1 // pred_check_branch
      %66 = sbr.rel (0) target = $region21
    $region20: #{mhatt_forward.1} parent=1 // pred_region
      _
    $region21: #{mhatt_forward.1} parent=1 // pred_fallthru
      _
    // Predicated region
    $region22: #{mhatt_forward.1} parent=1 // pred_check
      _
    $region23: #{mhatt_forward.1} parent=1 // pred_check_branch
      %68 = sbr.rel (0) target = $region25
    $region24: #{mhatt_forward.1} parent=1 // pred_region
      _
    $region25: #{mhatt_forward.1} parent=1 // pred_fallthru
      _
    // Predicated region
    $region26: #{mhatt_forward.1} parent=1 // pred_check
      _
    $region27: #{mhatt_forward.1} parent=1 // pred_check_branch
      %70 = sbr.rel (0) target = $region29
    $region28: #{mhatt_forward.1} parent=1 // pred_region
      %71 = dma.done [#allocation3], 256
    $region29: #{mhatt_forward.1} parent=1 // pred_fallthru
      _
    // Predicated region
    $region30: #{mhatt_forward.1} parent=1 // pred_check
      _
    $region31: #{mhatt_forward.1} parent=1 // pred_check_branch
      %73 = sbr.rel (0) target = $region33
    $region32: #{mhatt_forward.1} parent=1 // pred_region
      %74 = dma.done [#allocation6], 256
    $region33: #{mhatt_forward.1} parent=1 // pred_fallthru
      _
    // Predicated region
    $region34: #{mhatt_forward.1} parent=1 // pred_check
      _
    $region35: #{mhatt_forward.1} parent=1 // pred_check_branch
      %76 = sbr.rel (0) target = $region37
    $region36: #{mhatt_forward.1} parent=1 // pred_region
      %77 = dma.done [#allocation6], 256
    $region37: #{mhatt_forward.1} parent=1 // pred_fallthru
      _
    // Predicated region
    $region38: #{mhatt_forward.1} parent=1 // pred_check
      _
    $region39: #{mhatt_forward.1} parent=1 // pred_check_branch
      %79 = sbr.rel (0) target = $region41
    $region40: #{mhatt_forward.1} parent=1 // pred_region
      %80 = dma.done [#allocation9], 2048
    $region41: #{mhatt_forward.1} parent=1 // pred_fallthru
      _
    %v81 = vld [vmem:[%s4] sm:$0xf]
    %v82 = vld [vmem:[#allocation2] sm:$0xff]
    %v83 = vld [vmem:[#allocation2 + $0x8] sm:$0xff]
    %v84 = vld [vmem:[#allocation5] sm:$0xff]
    %v85 = vld [vmem:[#allocation5 + $0x8] sm:$0xff]
    %v86 = vld [vmem:[#allocation7] sm:$0xff]
    %v87 = vld [vmem:[#allocation7 + $0x8] sm:$0xff]
    %v88 = vld [vmem:[#allocation8] sm:$0xff]
    %v89 = vld [vmem:[#allocation8 + $0x8] sm:$0xff]
    %v90 = vld [vmem:[#allocation8 + $0x10] sm:$0xff]
    %v91 = vld [vmem:[#allocation8 + $0x18] sm:$0xff]
    %v92 = vld [vmem:[#allocation8 + $0x20] sm:$0xff]
    %v93 = vld [vmem:[#allocation8 + $0x28] sm:$0xff]
    %v94 = vld [vmem:[#allocation8 + $0x30] sm:$0xff]
    %v95 = vld [vmem:[#allocation8 + $0x38] sm:$0xff]
    %v96 = vld [vmem:[#allocation8 + $0x40] sm:$0xff]
    %v97 = vld [vmem:[#allocation8 + $0x48] sm:$0xff]
    %v98 = vld [vmem:[#allocation8 + $0x50] sm:$0xff]
    %v99 = vld [vmem:[#allocation8 + $0x58] sm:$0xff]
    %v100 = vld [vmem:[#allocation8 + $0x60] sm:$0xff]
    %v101 = vld [vmem:[#allocation8 + $0x68] sm:$0xff]
    %v102 = vld [vmem:[#allocation8 + $0x70] sm:$0xff]
    %v103 = vld [vmem:[#allocation8 + $0x78] sm:$0xff]
    %vm104 = vcmask 523264
    %v106 = vsel %vm104, %v82, 0
    %v109 = vsel %vm104, %v83, 0
    %v112 = vsel %vm104, %v84, 0
    %v115 = vsel %vm104, %v85, 0
    %v118 = vsel %vm104, %v86, 0
    %v121 = vsel %vm104, %v87, 0
    %123 = vmatprep.subr.mxu0 0.0
    %124 = vmatpush1.msra.mxu0 0.0
    %125 = vmatprep.subr.mxu0 0.0
    %126 = vmatpush1.msra.mxu0 0.0
    %127 = vmatprep.subr.mxu0 0.0
    %128 = vmatpush1.msra.mxu0 0.0
    %129 = vmatprep.subr.mxu0 0.0
    %130 = vmatpush1.msra.mxu0 0.0
    %131 = vmatprep.subr.mxu0 0.0
    %132 = vmatpush1.msra.mxu0 0.0
    %133 = vmatprep.subr.mxu0 0.0
    %134 = vmatpush1.msra.mxu0 0.0
    %135 = vmatprep.subr.mxu0 0.0
    %136 = vmatpush1.msra.mxu0 0.0
    %137 = vmatprep.subr.mxu0 0.0
    %138 = vmatpush1.msra.mxu0 0.0
    %139 = vmatprep.subr.mxu0 %v103
    %140 = vmatpush1.msra.mxu0 %v102
    %141 = vmatprep.subr.mxu0 %v101
    %142 = vmatpush1.msra.mxu0 %v100
    %143 = vmatprep.subr.mxu0 %v99
    %144 = vmatpush1.msra.mxu0 %v98
    %145 = vmatprep.subr.mxu0 %v97
    %146 = vmatpush1.msra.mxu0 %v96
    %147 = vmatprep.subr.mxu0 %v95
    %148 = vmatpush1.msra.mxu0 %v94
    %149 = vmatprep.subr.mxu0 %v93
    %150 = vmatpush1.msra.mxu0 %v92
    %151 = vmatprep.subr.mxu0 %v91
    %152 = vmatpush1.msra.mxu0 %v90
    %153 = vmatprep.subr.mxu0 %v89
    %154 = vmatpush1.msra.mxu0 %v88
    %155 = vmatprep.subr.mxu0 0.0
    %156 = vmatpush2.msra.mxu0 0.0
    %157 = vmatprep.subr.mxu0 0.0
    %158 = vmatpush2.msra.mxu0 0.0
    %159 = vmatprep.subr.mxu0 0.0
    %160 = vmatpush2.msra.mxu0 0.0
    %161 = vmatprep.subr.mxu0 0.0
    %162 = vmatpush2.msra.mxu0 0.0
    %163 = vmatprep.subr.mxu0 0.0
    %164 = vmatpush2.msra.mxu0 0.0
    %165 = vmatprep.subr.mxu0 0.0
    %166 = vmatpush2.msra.mxu0 0.0
    %167 = vmatprep.subr.mxu0 0.0
    %168 = vmatpush2.msra.mxu0 0.0
    %169 = vmatprep.subr.mxu0 0.0
    %170 = vmatpush2.msra.mxu0 0.0
    %171 = vmatprep.subr.mxu0 0.0
    %172 = vmatpush2.msra.mxu0 0.0
    %173 = vmatprep.subr.mxu0 0.0
    %174 = vmatpush2.msra.mxu0 0.0
    %175 = vmatprep.subr.mxu0 0.0
    %176 = vmatpush2.msra.mxu0 0.0
    %177 = vmatprep.subr.mxu0 0.0
    %178 = vmatpush2.msra.mxu0 0.0
    %179 = vmatprep.subr.mxu0 0.0
    %180 = vmatpush2.msra.mxu0 0.0
    %181 = vmatprep.subr.mxu0 0.0
    %182 = vmatpush2.msra.mxu0 0.0
    %183 = vmatprep.subr.mxu0 0.0
    %184 = vmatpush2.msra.mxu0 0.0
    %185 = vmatprep.subr.mxu0 0.0
    %186 = vmatpush2.msra.mxu0 0.0
    %187 = vmatprep.mubr.f32.mxu0 0.0
    %188 = vmatmul.mubr.f32.gmra.mxu0 %v106
    %v189 = vpop.f32.mrf.mxu0
    %v190 = vadd.f32 0.0, %v189
    %v191 = vpop.f32.mrf.mxu0
    %192 = vmatprep.mubr.f32.mxu0 0.0
    %193 = vmatmul.mubr.f32.gmra.mxu0 %v109
    %v194 = vpop.f32.mrf.mxu0
    %v195 = vadd.f32 0.0, %v194
    %v196 = vpop.f32.mrf.mxu0
    %197 = vmatprep.mubr.f32.mxu0 0.0
    %198 = vmatmul.mubr.f32.gmra.mxu0 %v112
    %v199 = vpop.f32.mrf.mxu0
    %v200 = vadd.f32 0.0, %v199
    %v201 = vpop.f32.mrf.mxu0
    %202 = vmatprep.mubr.f32.mxu0 0.0
    %203 = vmatmul.mubr.f32.gmra.mxu0 %v115
    %v204 = vpop.f32.mrf.mxu0
    %v205 = vadd.f32 0.0, %v204
    %v206 = vpop.f32.mrf.mxu0
    %207 = vmatprep.mubr.f32.mxu0 0.0
    %208 = vmatmul.mubr.f32.gmra.mxu0 %v118
    %v209 = vpop.f32.mrf.mxu0
    %v210 = vpop.f32.mrf.mxu0
    %v211 = vadd.f32 0.0, %v210
    %212 = vmatprep.mubr.f32.mxu0 0.0
    %213 = vmatmul.mubr.f32.gmra.mxu0 %v121
    %v214 = vpop.f32.mrf.mxu0
    %v215 = vpop.f32.mrf.mxu0
    %v216 = vadd.f32 0.0, %v215
    %217 = vdwg.mxu0
    %v218 = vlaneseq
    %v219 = vshrl.u32 %v218, 7
    %v220 = vsub.s32 0, %v219
    %v221 = vrot.slane %v81, %v220
    %v222 = vadd.f32 %v190, %v221
    %v223 = vadd.f32 %v195, %v221
    %v224 = vlaneseq
    %v225 = vshrl.u32 %v224, 7
    %v226 = vsub.s32 1, %v225
    %v227 = vrot.slane %v81, %v226
    %229 = vrot.lane.b32.xlu0 %v227, 64
    %v230 = vpop.permute.xlu0 %229
    %v232 = vadd.f32 %v200, %v230
    %v233 = vadd.f32 %v205, %v230
    %v234 = vlaneseq
    %v235 = vshrl.u32 %v234, 7
    %v236 = vsub.s32 2, %v235
    %v237 = vrot.slane %v81, %v236
    %v238 = vadd.f32 %v211, %v237
    %v239 = vadd.f32 %v216, %v237
    %v240 = vld [vmem:[%s5] sm:$0x3]
    %v241 = vlaneseq
    %v242 = vshrl.u32 %v241, 7
    %v243 = vsub.s32 0, %v242
    %v244 = vrot.slane %v240, %v243
    %246 = vrot.lane.b32.xlu0 %v232, 64
    %v247 = vpop.permute.xlu0 %246
    %vm248 = vcmask 130048
    %v250 = vsel %vm248, %v238, 0
    %v252 = vsel %vm248, %v247, 0
    %254 = vmatprep.subr.mxu0 0.0
    %255 = vmatpush1.xpose.msra.mxu0 0.0
    %256 = vmatprep.subr.mxu0 0.0
    %257 = vmatpush1.xpose.msra.mxu0 0.0
    %258 = vmatprep.subr.mxu0 0.0
    %259 = vmatpush1.xpose.msra.mxu0 0.0
    %260 = vmatprep.subr.mxu0 0.0
    %261 = vmatpush1.xpose.msra.mxu0 0.0
    %262 = vmatprep.subr.mxu0 0.0
    %263 = vmatpush1.xpose.msra.mxu0 0.0
    %264 = vmatprep.subr.mxu0 0.0
    %265 = vmatpush1.xpose.msra.mxu0 0.0
    %266 = vmatprep.subr.mxu0 0.0
    %267 = vmatpush1.xpose.msra.mxu0 0.0
    %268 = vmatprep.subr.mxu0 0.0
    %269 = vmatpush1.xpose.msra.mxu0 0.0
    %270 = vmatprep.subr.mxu0 0.0
    %271 = vmatpush1.xpose.msra.mxu0 0.0
    %272 = vmatprep.subr.mxu0 0.0
    %273 = vmatpush1.xpose.msra.mxu0 0.0
    %274 = vmatprep.subr.mxu0 0.0
    %275 = vmatpush1.xpose.msra.mxu0 0.0
    %276 = vmatprep.subr.mxu0 0.0
    %277 = vmatpush1.xpose.msra.mxu0 0.0
    %278 = vmatprep.subr.mxu0 0.0
    %279 = vmatpush1.xpose.msra.mxu0 0.0
    %280 = vmatprep.subr.mxu0 0.0
    %281 = vmatpush1.xpose.msra.mxu0 0.0
    %282 = vmatprep.subr.mxu0 0.0
    %283 = vmatpush1.xpose.msra.mxu0 0.0
    %284 = vmatprep.subr.mxu0 0.0
    %285 = vmatpush1.xpose.msra.mxu0 %v252
    %286 = vmatprep.subr.mxu0 0.0
    %287 = vmatpush2.xpose.msra.mxu0 0.0
    %288 = vmatprep.subr.mxu0 0.0
    %289 = vmatpush2.xpose.msra.mxu0 0.0
    %290 = vmatprep.subr.mxu0 0.0
    %291 = vmatpush2.xpose.msra.mxu0 0.0
    %292 = vmatprep.subr.mxu0 0.0
    %293 = vmatpush2.xpose.msra.mxu0 0.0
    %294 = vmatprep.subr.mxu0 0.0
    %295 = vmatpush2.xpose.msra.mxu0 0.0
    %296 = vmatprep.subr.mxu0 0.0
    %297 = vmatpush2.xpose.msra.mxu0 0.0
    %298 = vmatprep.subr.mxu0 0.0
    %299 = vmatpush2.xpose.msra.mxu0 0.0
    %300 = vmatprep.subr.mxu0 0.0
    %301 = vmatpush2.xpose.msra.mxu0 0.0
    %302 = vmatprep.subr.mxu0 0.0
    %303 = vmatpush2.xpose.msra.mxu0 0.0
    %304 = vmatprep.subr.mxu0 0.0
    %305 = vmatpush2.xpose.msra.mxu0 0.0
    %306 = vmatprep.subr.mxu0 0.0
    %307 = vmatpush2.xpose.msra.mxu0 0.0
    %308 = vmatprep.subr.mxu0 0.0
    %309 = vmatpush2.xpose.msra.mxu0 0.0
    %310 = vmatprep.subr.mxu0 0.0
    %311 = vmatpush2.xpose.msra.mxu0 0.0
    %312 = vmatprep.subr.mxu0 0.0
    %313 = vmatpush2.xpose.msra.mxu0 0.0
    %314 = vmatprep.subr.mxu0 0.0
    %315 = vmatpush2.xpose.msra.mxu0 0.0
    %316 = vmatprep.subr.mxu0 0.0
    %317 = vmatpush2.xpose.msra.mxu0 0.0
    %318 = vmatprep.mubr.f32.mxu0 0.0
    %319 = vmatmul.mubr.f32.gmra.mxu0 %v250
    %v320 = vpop.f32.mrf.mxu0
    %v321 = vadd.f32 %v244, %v320
    %v322 = vpop.f32.mrf.mxu0
    %323 = vdwg.mxu0
    %vm324 = vcmask 64512
    %v325 = vsel %vm324, %v321, -inf
    %326 = vmax.xlane.f32.xlu0 %v325
    %v327 = vpop.xlane.xlu0 %326
    %v328 = vsub.f32 %v321, %v327
    %v329 = vmul.f32 %v328, 1.442695
    %v330 = vpow.pop %v329
    %v331 = vsel %vm324, %v330, 0.0
    %332 = vadd.xlane.f32.xlu0 %v331
    %v333 = vpop.xlane.xlu0 %332
    %v334 = vrcp.pop %v333
    %v335 = vmul.f32 %v330, %v334
    %v337 = vsel %vm324, %v335, 0
    %339 = vmatprep.subr.mxu0 0.0
    %340 = vmatpush1.msra.mxu0 0.0
    %341 = vmatprep.subr.mxu0 0.0
    %342 = vmatpush1.msra.mxu0 0.0
    %343 = vmatprep.subr.mxu0 0.0
    %344 = vmatpush1.msra.mxu0 0.0
    %345 = vmatprep.subr.mxu0 0.0
    %346 = vmatpush1.msra.mxu0 0.0
    %347 = vmatprep.subr.mxu0 0.0
    %348 = vmatpush1.msra.mxu0 0.0
    %349 = vmatprep.subr.mxu0 0.0
    %350 = vmatpush1.msra.mxu0 0.0
    %351 = vmatprep.subr.mxu0 0.0
    %352 = vmatpush1.msra.mxu0 0.0
    %353 = vmatprep.subr.mxu0 0.0
    %354 = vmatpush1.msra.mxu0 0.0
    %355 = vmatprep.subr.mxu0 0.0
    %356 = vmatpush1.msra.mxu0 0.0
    %357 = vmatprep.subr.mxu0 0.0
    %358 = vmatpush1.msra.mxu0 0.0
    %359 = vmatprep.subr.mxu0 0.0
    %360 = vmatpush1.msra.mxu0 0.0
    %361 = vmatprep.subr.mxu0 0.0
    %362 = vmatpush1.msra.mxu0 0.0
    %363 = vmatprep.subr.mxu0 0.0
    %364 = vmatpush1.msra.mxu0 0.0
    %365 = vmatprep.subr.mxu0 0.0
    %366 = vmatpush1.msra.mxu0 0.0
    %367 = vmatprep.subr.mxu0 0.0
    %368 = vmatpush1.msra.mxu0 0.0
    %369 = vmatprep.subr.mxu0 0.0
    %370 = vmatpush1.msra.mxu0 %v222
    %371 = vmatprep.subr.mxu0 0.0
    %372 = vmatpush2.msra.mxu0 0.0
    %373 = vmatprep.subr.mxu0 0.0
    %374 = vmatpush2.msra.mxu0 0.0
    %375 = vmatprep.subr.mxu0 0.0
    %376 = vmatpush2.msra.mxu0 0.0
    %377 = vmatprep.subr.mxu0 0.0
    %378 = vmatpush2.msra.mxu0 0.0
    %379 = vmatprep.subr.mxu0 0.0
    %380 = vmatpush2.msra.mxu0 0.0
    %381 = vmatprep.subr.mxu0 0.0
    %382 = vmatpush2.msra.mxu0 0.0
    %383 = vmatprep.subr.mxu0 0.0
    %384 = vmatpush2.msra.mxu0 0.0
    %385 = vmatprep.subr.mxu0 0.0
    %386 = vmatpush2.msra.mxu0 0.0
    %387 = vmatprep.subr.mxu0 0.0
    %388 = vmatpush2.msra.mxu0 0.0
    %389 = vmatprep.subr.mxu0 0.0
    %390 = vmatpush2.msra.mxu0 0.0
    %391 = vmatprep.subr.mxu0 0.0
    %392 = vmatpush2.msra.mxu0 0.0
    %393 = vmatprep.subr.mxu0 0.0
    %394 = vmatpush2.msra.mxu0 0.0
    %395 = vmatprep.subr.mxu0 0.0
    %396 = vmatpush2.msra.mxu0 0.0
    %397 = vmatprep.subr.mxu0 0.0
    %398 = vmatpush2.msra.mxu0 0.0
    %399 = vmatprep.subr.mxu0 0.0
    %400 = vmatpush2.msra.mxu0 0.0
    %401 = vmatprep.subr.mxu0 0.0
    %402 = vmatpush2.msra.mxu0 0.0
    %403 = vmatprep.mubr.f32.mxu0 0.0
    %404 = vmatmul.mubr.f32.gmra.mxu0 %v337
    %v405 = vpop.f32.mrf.mxu0
    %v406 = vadd.f32 0.0, %v405
    %v407 = vpop.f32.mrf.mxu0
    %408 = vdwg.mxu0
    %409 = vrot.lane.b32.xlu0 %v238, 112
    %v410 = vpop.permute.xlu0 %409
    %411 = vrot.lane.b32.xlu0 %v232, 48
    %v412 = vpop.permute.xlu0 %411
    %v413 = vsel %vm248, %v410, 0
    %v415 = vsel %vm248, %v412, 0
    %417 = vmatprep.subr.mxu0 0.0
    %418 = vmatpush1.xpose.msra.mxu0 0.0
    %419 = vmatprep.subr.mxu0 0.0
    %420 = vmatpush1.xpose.msra.mxu0 0.0
    %421 = vmatprep.subr.mxu0 0.0
    %422 = vmatpush1.xpose.msra.mxu0 0.0
    %423 = vmatprep.subr.mxu0 0.0
    %424 = vmatpush1.xpose.msra.mxu0 0.0
    %425 = vmatprep.subr.mxu0 0.0
    %426 = vmatpush1.xpose.msra.mxu0 0.0
    %427 = vmatprep.subr.mxu0 0.0
    %428 = vmatpush1.xpose.msra.mxu0 0.0
    %429 = vmatprep.subr.mxu0 0.0
    %430 = vmatpush1.xpose.msra.mxu0 0.0
    %431 = vmatprep.subr.mxu0 0.0
    %432 = vmatpush1.xpose.msra.mxu0 0.0
    %433 = vmatprep.subr.mxu0 0.0
    %434 = vmatpush1.xpose.msra.mxu0 0.0
    %435 = vmatprep.subr.mxu0 0.0
    %436 = vmatpush1.xpose.msra.mxu0 0.0
    %437 = vmatprep.subr.mxu0 0.0
    %438 = vmatpush1.xpose.msra.mxu0 0.0
    %439 = vmatprep.subr.mxu0 0.0
    %440 = vmatpush1.xpose.msra.mxu0 0.0
    %441 = vmatprep.subr.mxu0 0.0
    %442 = vmatpush1.xpose.msra.mxu0 0.0
    %443 = vmatprep.subr.mxu0 0.0
    %444 = vmatpush1.xpose.msra.mxu0 0.0
    %445 = vmatprep.subr.mxu0 0.0
    %446 = vmatpush1.xpose.msra.mxu0 0.0
    %447 = vmatprep.subr.mxu0 0.0
    %448 = vmatpush1.xpose.msra.mxu0 %v415
    %449 = vmatprep.subr.mxu0 0.0
    %450 = vmatpush2.xpose.msra.mxu0 0.0
    %451 = vmatprep.subr.mxu0 0.0
    %452 = vmatpush2.xpose.msra.mxu0 0.0
    %453 = vmatprep.subr.mxu0 0.0
    %454 = vmatpush2.xpose.msra.mxu0 0.0
    %455 = vmatprep.subr.mxu0 0.0
    %456 = vmatpush2.xpose.msra.mxu0 0.0
    %457 = vmatprep.subr.mxu0 0.0
    %458 = vmatpush2.xpose.msra.mxu0 0.0
    %459 = vmatprep.subr.mxu0 0.0
    %460 = vmatpush2.xpose.msra.mxu0 0.0
    %461 = vmatprep.subr.mxu0 0.0
    %462 = vmatpush2.xpose.msra.mxu0 0.0
    %463 = vmatprep.subr.mxu0 0.0
    %464 = vmatpush2.xpose.msra.mxu0 0.0
    %465 = vmatprep.subr.mxu0 0.0
    %466 = vmatpush2.xpose.msra.mxu0 0.0
    %467 = vmatprep.subr.mxu0 0.0
    %468 = vmatpush2.xpose.msra.mxu0 0.0
    %469 = vmatprep.subr.mxu0 0.0
    %470 = vmatpush2.xpose.msra.mxu0 0.0
    %471 = vmatprep.subr.mxu0 0.0
    %472 = vmatpush2.xpose.msra.mxu0 0.0
    %473 = vmatprep.subr.mxu0 0.0
    %474 = vmatpush2.xpose.msra.mxu0 0.0
    %475 = vmatprep.subr.mxu0 0.0
    %476 = vmatpush2.xpose.msra.mxu0 0.0
    %477 = vmatprep.subr.mxu0 0.0
    %478 = vmatpush2.xpose.msra.mxu0 0.0
    %479 = vmatprep.subr.mxu0 0.0
    %480 = vmatpush2.xpose.msra.mxu0 0.0
    %481 = vmatprep.mubr.f32.mxu0 0.0
    %482 = vmatmul.mubr.f32.gmra.mxu0 %v413
    %v483 = vpop.f32.mrf.mxu0
    %v484 = vadd.f32 %v244, %v483
    %v485 = vpop.f32.mrf.mxu0
    %486 = vdwg.mxu0
    %v487 = vsel %vm324, %v484, -inf
    %488 = vmax.xlane.f32.xlu0 %v487
    %v489 = vpop.xlane.xlu0 %488
    %v490 = vsub.f32 %v484, %v489
    %v491 = vmul.f32 %v490, 1.442695
    %v492 = vpow.pop %v491
    %v493 = vsel %vm324, %v492, 0.0
    %494 = vadd.xlane.f32.xlu0 %v493
    %v495 = vpop.xlane.xlu0 %494
    %v496 = vrcp.pop %v495
    %v497 = vmul.f32 %v492, %v496
    %499 = vrot.lane.b32.xlu0 %v222, 112
    %v500 = vpop.permute.xlu0 %499
    %v503 = vsel %vm324, %v497, 0
    %505 = vmatprep.subr.mxu0 0.0
    %506 = vmatpush1.msra.mxu0 0.0
    %507 = vmatprep.subr.mxu0 0.0
    %508 = vmatpush1.msra.mxu0 0.0
    %509 = vmatprep.subr.mxu0 0.0
    %510 = vmatpush1.msra.mxu0 0.0
    %511 = vmatprep.subr.mxu0 0.0
    %512 = vmatpush1.msra.mxu0 0.0
    %513 = vmatprep.subr.mxu0 0.0
    %514 = vmatpush1.msra.mxu0 0.0
    %515 = vmatprep.subr.mxu0 0.0
    %516 = vmatpush1.msra.mxu0 0.0
    %517 = vmatprep.subr.mxu0 0.0
    %518 = vmatpush1.msra.mxu0 0.0
    %519 = vmatprep.subr.mxu0 0.0
    %520 = vmatpush1.msra.mxu0 0.0
    %521 = vmatprep.subr.mxu0 0.0
    %522 = vmatpush1.msra.mxu0 0.0
    %523 = vmatprep.subr.mxu0 0.0
    %524 = vmatpush1.msra.mxu0 0.0
    %525 = vmatprep.subr.mxu0 0.0
    %526 = vmatpush1.msra.mxu0 0.0
    %527 = vmatprep.subr.mxu0 0.0
    %528 = vmatpush1.msra.mxu0 0.0
    %529 = vmatprep.subr.mxu0 0.0
    %530 = vmatpush1.msra.mxu0 0.0
    %531 = vmatprep.subr.mxu0 0.0
    %532 = vmatpush1.msra.mxu0 0.0
    %533 = vmatprep.subr.mxu0 0.0
    %534 = vmatpush1.msra.mxu0 0.0
    %535 = vmatprep.subr.mxu0 0.0
    %536 = vmatpush1.msra.mxu0 %v500
    %537 = vmatprep.subr.mxu0 0.0
    %538 = vmatpush2.msra.mxu0 0.0
    %539 = vmatprep.subr.mxu0 0.0
    %540 = vmatpush2.msra.mxu0 0.0
    %541 = vmatprep.subr.mxu0 0.0
    %542 = vmatpush2.msra.mxu0 0.0
    %543 = vmatprep.subr.mxu0 0.0
    %544 = vmatpush2.msra.mxu0 0.0
    %545 = vmatprep.subr.mxu0 0.0
    %546 = vmatpush2.msra.mxu0 0.0
    %547 = vmatprep.subr.mxu0 0.0
    %548 = vmatpush2.msra.mxu0 0.0
    %549 = vmatprep.subr.mxu0 0.0
    %550 = vmatpush2.msra.mxu0 0.0
    %551 = vmatprep.subr.mxu0 0.0
    %552 = vmatpush2.msra.mxu0 0.0
    %553 = vmatprep.subr.mxu0 0.0
    %554 = vmatpush2.msra.mxu0 0.0
    %555 = vmatprep.subr.mxu0 0.0
    %556 = vmatpush2.msra.mxu0 0.0
    %557 = vmatprep.subr.mxu0 0.0
    %558 = vmatpush2.msra.mxu0 0.0
    %559 = vmatprep.subr.mxu0 0.0
    %560 = vmatpush2.msra.mxu0 0.0
    %561 = vmatprep.subr.mxu0 0.0
    %562 = vmatpush2.msra.mxu0 0.0
    %563 = vmatprep.subr.mxu0 0.0
    %564 = vmatpush2.msra.mxu0 0.0
    %565 = vmatprep.subr.mxu0 0.0
    %566 = vmatpush2.msra.mxu0 0.0
    %567 = vmatprep.subr.mxu0 0.0
    %568 = vmatpush2.msra.mxu0 0.0
    %569 = vmatprep.mubr.f32.mxu0 0.0
    %570 = vmatmul.mubr.f32.gmra.mxu0 %v503
    %v571 = vpop.f32.mrf.mxu0
    %v572 = vadd.f32 0.0, %v571
    %v573 = vpop.f32.mrf.mxu0
    %574 = vdwg.mxu0
    %575 = vrot.lane.b32.xlu0 %v238, 96
    %v576 = vpop.permute.xlu0 %575
    %577 = vrot.lane.b32.xlu0 %v232, 32
    %v578 = vpop.permute.xlu0 %577
    %v579 = vsel %vm248, %v576, 0
    %v581 = vsel %vm248, %v578, 0
    %583 = vmatprep.subr.mxu0 0.0
    %584 = vmatpush1.xpose.msra.mxu0 0.0
    %585 = vmatprep.subr.mxu0 0.0
    %586 = vmatpush1.xpose.msra.mxu0 0.0
    %587 = vmatprep.subr.mxu0 0.0
    %588 = vmatpush1.xpose.msra.mxu0 0.0
    %589 = vmatprep.subr.mxu0 0.0
    %590 = vmatpush1.xpose.msra.mxu0 0.0
    %591 = vmatprep.subr.mxu0 0.0
    %592 = vmatpush1.xpose.msra.mxu0 0.0
    %593 = vmatprep.subr.mxu0 0.0
    %594 = vmatpush1.xpose.msra.mxu0 0.0
    %595 = vmatprep.subr.mxu0 0.0
    %596 = vmatpush1.xpose.msra.mxu0 0.0
    %597 = vmatprep.subr.mxu0 0.0
    %598 = vmatpush1.xpose.msra.mxu0 0.0
    %599 = vmatprep.subr.mxu0 0.0
    %600 = vmatpush1.xpose.msra.mxu0 0.0
    %601 = vmatprep.subr.mxu0 0.0
    %602 = vmatpush1.xpose.msra.mxu0 0.0
    %603 = vmatprep.subr.mxu0 0.0
    %604 = vmatpush1.xpose.msra.mxu0 0.0
    %605 = vmatprep.subr.mxu0 0.0
    %606 = vmatpush1.xpose.msra.mxu0 0.0
    %607 = vmatprep.subr.mxu0 0.0
    %608 = vmatpush1.xpose.msra.mxu0 0.0
    %609 = vmatprep.subr.mxu0 0.0
    %610 = vmatpush1.xpose.msra.mxu0 0.0
    %611 = vmatprep.subr.mxu0 0.0
    %612 = vmatpush1.xpose.msra.mxu0 0.0
    %613 = vmatprep.subr.mxu0 0.0
    %614 = vmatpush1.xpose.msra.mxu0 %v581
    %615 = vmatprep.subr.mxu0 0.0
    %616 = vmatpush2.xpose.msra.mxu0 0.0
    %617 = vmatprep.subr.mxu0 0.0
    %618 = vmatpush2.xpose.msra.mxu0 0.0
    %619 = vmatprep.subr.mxu0 0.0
    %620 = vmatpush2.xpose.msra.mxu0 0.0
    %621 = vmatprep.subr.mxu0 0.0
    %622 = vmatpush2.xpose.msra.mxu0 0.0
    %623 = vmatprep.subr.mxu0 0.0
    %624 = vmatpush2.xpose.msra.mxu0 0.0
    %625 = vmatprep.subr.mxu0 0.0
    %626 = vmatpush2.xpose.msra.mxu0 0.0
    %627 = vmatprep.subr.mxu0 0.0
    %628 = vmatpush2.xpose.msra.mxu0 0.0
    %629 = vmatprep.subr.mxu0 0.0
    %630 = vmatpush2.xpose.msra.mxu0 0.0
    %631 = vmatprep.subr.mxu0 0.0
    %632 = vmatpush2.xpose.msra.mxu0 0.0
    %633 = vmatprep.subr.mxu0 0.0
    %634 = vmatpush2.xpose.msra.mxu0 0.0
    %635 = vmatprep.subr.mxu0 0.0
    %636 = vmatpush2.xpose.msra.mxu0 0.0
    %637 = vmatprep.subr.mxu0 0.0
    %638 = vmatpush2.xpose.msra.mxu0 0.0
    %639 = vmatprep.subr.mxu0 0.0
    %640 = vmatpush2.xpose.msra.mxu0 0.0
    %641 = vmatprep.subr.mxu0 0.0
    %642 = vmatpush2.xpose.msra.mxu0 0.0
    %643 = vmatprep.subr.mxu0 0.0
    %644 = vmatpush2.xpose.msra.mxu0 0.0
    %645 = vmatprep.subr.mxu0 0.0
    %646 = vmatpush2.xpose.msra.mxu0 0.0
    %647 = vmatprep.mubr.f32.mxu0 0.0
    %648 = vmatmul.mubr.f32.gmra.mxu0 %v579
    %v649 = vpop.f32.mrf.mxu0
    %v650 = vadd.f32 %v244, %v649
    %v651 = vpop.f32.mrf.mxu0
    %652 = vdwg.mxu0
    %v653 = vsel %vm324, %v650, -inf
    %654 = vmax.xlane.f32.xlu0 %v653
    %v655 = vpop.xlane.xlu0 %654
    %v656 = vsub.f32 %v650, %v655
    %v657 = vmul.f32 %v656, 1.442695
    %v658 = vpow.pop %v657
    %v659 = vsel %vm324, %v658, 0.0
    %660 = vadd.xlane.f32.xlu0 %v659
    %v661 = vpop.xlane.xlu0 %660
    %v662 = vrcp.pop %v661
    %v663 = vmul.f32 %v658, %v662
    %664 = vrot.lane.b32.xlu0 %v222, 96
    %v665 = vpop.permute.xlu0 %664
    %v668 = vsel %vm324, %v663, 0
    %670 = vmatprep.subr.mxu0 0.0
    %671 = vmatpush1.msra.mxu0 0.0
    %672 = vmatprep.subr.mxu0 0.0
    %673 = vmatpush1.msra.mxu0 0.0
    %674 = vmatprep.subr.mxu0 0.0
    %675 = vmatpush1.msra.mxu0 0.0
    %676 = vmatprep.subr.mxu0 0.0
    %677 = vmatpush1.msra.mxu0 0.0
    %678 = vmatprep.subr.mxu0 0.0
    %679 = vmatpush1.msra.mxu0 0.0
    %680 = vmatprep.subr.mxu0 0.0
    %681 = vmatpush1.msra.mxu0 0.0
    %682 = vmatprep.subr.mxu0 0.0
    %683 = vmatpush1.msra.mxu0 0.0
    %684 = vmatprep.subr.mxu0 0.0
    %685 = vmatpush1.msra.mxu0 0.0
    %686 = vmatprep.subr.mxu0 0.0
    %687 = vmatpush1.msra.mxu0 0.0
    %688 = vmatprep.subr.mxu0 0.0
    %689 = vmatpush1.msra.mxu0 0.0
    %690 = vmatprep.subr.mxu0 0.0
    %691 = vmatpush1.msra.mxu0 0.0
    %692 = vmatprep.subr.mxu0 0.0
    %693 = vmatpush1.msra.mxu0 0.0
    %694 = vmatprep.subr.mxu0 0.0
    %695 = vmatpush1.msra.mxu0 0.0
    %696 = vmatprep.subr.mxu0 0.0
    %697 = vmatpush1.msra.mxu0 0.0
    %698 = vmatprep.subr.mxu0 0.0
    %699 = vmatpush1.msra.mxu0 0.0
    %700 = vmatprep.subr.mxu0 0.0
    %701 = vmatpush1.msra.mxu0 %v665
    %702 = vmatprep.subr.mxu0 0.0
    %703 = vmatpush2.msra.mxu0 0.0
    %704 = vmatprep.subr.mxu0 0.0
    %705 = vmatpush2.msra.mxu0 0.0
    %706 = vmatprep.subr.mxu0 0.0
    %707 = vmatpush2.msra.mxu0 0.0
    %708 = vmatprep.subr.mxu0 0.0
    %709 = vmatpush2.msra.mxu0 0.0
    %710 = vmatprep.subr.mxu0 0.0
    %711 = vmatpush2.msra.mxu0 0.0
    %712 = vmatprep.subr.mxu0 0.0
    %713 = vmatpush2.msra.mxu0 0.0
    %714 = vmatprep.subr.mxu0 0.0
    %715 = vmatpush2.msra.mxu0 0.0
    %716 = vmatprep.subr.mxu0 0.0
    %717 = vmatpush2.msra.mxu0 0.0
    %718 = vmatprep.subr.mxu0 0.0
    %719 = vmatpush2.msra.mxu0 0.0
    %720 = vmatprep.subr.mxu0 0.0
    %721 = vmatpush2.msra.mxu0 0.0
    %722 = vmatprep.subr.mxu0 0.0
    %723 = vmatpush2.msra.mxu0 0.0
    %724 = vmatprep.subr.mxu0 0.0
    %725 = vmatpush2.msra.mxu0 0.0
    %726 = vmatprep.subr.mxu0 0.0
    %727 = vmatpush2.msra.mxu0 0.0
    %728 = vmatprep.subr.mxu0 0.0
    %729 = vmatpush2.msra.mxu0 0.0
    %730 = vmatprep.subr.mxu0 0.0
    %731 = vmatpush2.msra.mxu0 0.0
    %732 = vmatprep.subr.mxu0 0.0
    %733 = vmatpush2.msra.mxu0 0.0
    %734 = vmatprep.mubr.f32.mxu0 0.0
    %735 = vmatmul.mubr.f32.gmra.mxu0 %v668
    %v736 = vpop.f32.mrf.mxu0
    %v737 = vadd.f32 0.0, %v736
    %v738 = vpop.f32.mrf.mxu0
    %739 = vdwg.mxu0
    %740 = vrot.lane.b32.xlu0 %v238, 80
    %v741 = vpop.permute.xlu0 %740
    %742 = vrot.lane.b32.xlu0 %v232, 16
    %v743 = vpop.permute.xlu0 %742
    %v744 = vsel %vm248, %v741, 0
    %v746 = vsel %vm248, %v743, 0
    %748 = vmatprep.subr.mxu0 0.0
    %749 = vmatpush1.xpose.msra.mxu0 0.0
    %750 = vmatprep.subr.mxu0 0.0
    %751 = vmatpush1.xpose.msra.mxu0 0.0
    %752 = vmatprep.subr.mxu0 0.0
    %753 = vmatpush1.xpose.msra.mxu0 0.0
    %754 = vmatprep.subr.mxu0 0.0
    %755 = vmatpush1.xpose.msra.mxu0 0.0
    %756 = vmatprep.subr.mxu0 0.0
    %757 = vmatpush1.xpose.msra.mxu0 0.0
    %758 = vmatprep.subr.mxu0 0.0
    %759 = vmatpush1.xpose.msra.mxu0 0.0
    %760 = vmatprep.subr.mxu0 0.0
    %761 = vmatpush1.xpose.msra.mxu0 0.0
    %762 = vmatprep.subr.mxu0 0.0
    %763 = vmatpush1.xpose.msra.mxu0 0.0
    %764 = vmatprep.subr.mxu0 0.0
    %765 = vmatpush1.xpose.msra.mxu0 0.0
    %766 = vmatprep.subr.mxu0 0.0
    %767 = vmatpush1.xpose.msra.mxu0 0.0
    %768 = vmatprep.subr.mxu0 0.0
    %769 = vmatpush1.xpose.msra.mxu0 0.0
    %770 = vmatprep.subr.mxu0 0.0
    %771 = vmatpush1.xpose.msra.mxu0 0.0
    %772 = vmatprep.subr.mxu0 0.0
    %773 = vmatpush1.xpose.msra.mxu0 0.0
    %774 = vmatprep.subr.mxu0 0.0
    %775 = vmatpush1.xpose.msra.mxu0 0.0
    %776 = vmatprep.subr.mxu0 0.0
    %777 = vmatpush1.xpose.msra.mxu0 0.0
    %778 = vmatprep.subr.mxu0 0.0
    %779 = vmatpush1.xpose.msra.mxu0 %v746
    %780 = vmatprep.subr.mxu0 0.0
    %781 = vmatpush2.xpose.msra.mxu0 0.0
    %782 = vmatprep.subr.mxu0 0.0
    %783 = vmatpush2.xpose.msra.mxu0 0.0
    %784 = vmatprep.subr.mxu0 0.0
    %785 = vmatpush2.xpose.msra.mxu0 0.0
    %786 = vmatprep.subr.mxu0 0.0
    %787 = vmatpush2.xpose.msra.mxu0 0.0
    %788 = vmatprep.subr.mxu0 0.0
    %789 = vmatpush2.xpose.msra.mxu0 0.0
    %790 = vmatprep.subr.mxu0 0.0
    %791 = vmatpush2.xpose.msra.mxu0 0.0
    %792 = vmatprep.subr.mxu0 0.0
    %793 = vmatpush2.xpose.msra.mxu0 0.0
    %794 = vmatprep.subr.mxu0 0.0
    %795 = vmatpush2.xpose.msra.mxu0 0.0
    %796 = vmatprep.subr.mxu0 0.0
    %797 = vmatpush2.xpose.msra.mxu0 0.0
    %798 = vmatprep.subr.mxu0 0.0
    %799 = vmatpush2.xpose.msra.mxu0 0.0
    %800 = vmatprep.subr.mxu0 0.0
    %801 = vmatpush2.xpose.msra.mxu0 0.0
    %802 = vmatprep.subr.mxu0 0.0
    %803 = vmatpush2.xpose.msra.mxu0 0.0
    %804 = vmatprep.subr.mxu0 0.0
    %805 = vmatpush2.xpose.msra.mxu0 0.0
    %806 = vmatprep.subr.mxu0 0.0
    %807 = vmatpush2.xpose.msra.mxu0 0.0
    %808 = vmatprep.subr.mxu0 0.0
    %809 = vmatpush2.xpose.msra.mxu0 0.0
    %810 = vmatprep.subr.mxu0 0.0
    %811 = vmatpush2.xpose.msra.mxu0 0.0
    %812 = vmatprep.mubr.f32.mxu0 0.0
    %813 = vmatmul.mubr.f32.gmra.mxu0 %v744
    %v814 = vpop.f32.mrf.mxu0
    %v815 = vadd.f32 %v244, %v814
    %v816 = vpop.f32.mrf.mxu0
    %817 = vdwg.mxu0
    %v818 = vsel %vm324, %v815, -inf
    %819 = vmax.xlane.f32.xlu0 %v818
    %v820 = vpop.xlane.xlu0 %819
    %v821 = vsub.f32 %v815, %v820
    %v822 = vmul.f32 %v821, 1.442695
    %v823 = vpow.pop %v822
    %v824 = vsel %vm324, %v823, 0.0
    %825 = vadd.xlane.f32.xlu0 %v824
    %v826 = vpop.xlane.xlu0 %825
    %v827 = vrcp.pop %v826
    %v828 = vmul.f32 %v823, %v827
    %829 = vrot.lane.b32.xlu0 %v222, 80
    %v830 = vpop.permute.xlu0 %829
    %v833 = vsel %vm324, %v828, 0
    %835 = vmatprep.subr.mxu0 0.0
    %836 = vmatpush1.msra.mxu0 0.0
    %837 = vmatprep.subr.mxu0 0.0
    %838 = vmatpush1.msra.mxu0 0.0
    %839 = vmatprep.subr.mxu0 0.0
    %840 = vmatpush1.msra.mxu0 0.0
    %841 = vmatprep.subr.mxu0 0.0
    %842 = vmatpush1.msra.mxu0 0.0
    %843 = vmatprep.subr.mxu0 0.0
    %844 = vmatpush1.msra.mxu0 0.0
    %845 = vmatprep.subr.mxu0 0.0
    %846 = vmatpush1.msra.mxu0 0.0
    %847 = vmatprep.subr.mxu0 0.0
    %848 = vmatpush1.msra.mxu0 0.0
    %849 = vmatprep.subr.mxu0 0.0
    %850 = vmatpush1.msra.mxu0 0.0
    %851 = vmatprep.subr.mxu0 0.0
    %852 = vmatpush1.msra.mxu0 0.0
    %853 = vmatprep.subr.mxu0 0.0
    %854 = vmatpush1.msra.mxu0 0.0
    %855 = vmatprep.subr.mxu0 0.0
    %856 = vmatpush1.msra.mxu0 0.0
    %857 = vmatprep.subr.mxu0 0.0
    %858 = vmatpush1.msra.mxu0 0.0
    %859 = vmatprep.subr.mxu0 0.0
    %860 = vmatpush1.msra.mxu0 0.0
    %861 = vmatprep.subr.mxu0 0.0
    %862 = vmatpush1.msra.mxu0 0.0
    %863 = vmatprep.subr.mxu0 0.0
    %864 = vmatpush1.msra.mxu0 0.0
    %865 = vmatprep.subr.mxu0 0.0
    %866 = vmatpush1.msra.mxu0 %v830
    %867 = vmatprep.subr.mxu0 0.0
    %868 = vmatpush2.msra.mxu0 0.0
    %869 = vmatprep.subr.mxu0 0.0
    %870 = vmatpush2.msra.mxu0 0.0
    %871 = vmatprep.subr.mxu0 0.0
    %872 = vmatpush2.msra.mxu0 0.0
    %873 = vmatprep.subr.mxu0 0.0
    %874 = vmatpush2.msra.mxu0 0.0
    %875 = vmatprep.subr.mxu0 0.0
    %876 = vmatpush2.msra.mxu0 0.0
    %877 = vmatprep.subr.mxu0 0.0
    %878 = vmatpush2.msra.mxu0 0.0
    %879 = vmatprep.subr.mxu0 0.0
    %880 = vmatpush2.msra.mxu0 0.0
    %881 = vmatprep.subr.mxu0 0.0
    %882 = vmatpush2.msra.mxu0 0.0
    %883 = vmatprep.subr.mxu0 0.0
    %884 = vmatpush2.msra.mxu0 0.0
    %885 = vmatprep.subr.mxu0 0.0
    %886 = vmatpush2.msra.mxu0 0.0
    %887 = vmatprep.subr.mxu0 0.0
    %888 = vmatpush2.msra.mxu0 0.0
    %889 = vmatprep.subr.mxu0 0.0
    %890 = vmatpush2.msra.mxu0 0.0
    %891 = vmatprep.subr.mxu0 0.0
    %892 = vmatpush2.msra.mxu0 0.0
    %893 = vmatprep.subr.mxu0 0.0
    %894 = vmatpush2.msra.mxu0 0.0
    %895 = vmatprep.subr.mxu0 0.0
    %896 = vmatpush2.msra.mxu0 0.0
    %897 = vmatprep.subr.mxu0 0.0
    %898 = vmatpush2.msra.mxu0 0.0
    %899 = vmatprep.mubr.f32.mxu0 0.0
    %900 = vmatmul.mubr.f32.gmra.mxu0 %v833
    %v901 = vpop.f32.mrf.mxu0
    %v902 = vadd.f32 0.0, %v901
    %v903 = vpop.f32.mrf.mxu0
    %904 = vdwg.mxu0
    %905 = vrot.lane.b32.xlu0 %v497, 8
    %v906 = vpop.permute.xlu0 %905
    %908 = vrot.lane.b32.xlu0 %v663, 16
    %v909 = vpop.permute.xlu0 %908
    %911 = vrot.lane.b32.xlu0 %v828, 24
    %v912 = vpop.permute.xlu0 %911
    %v914 = vsel %vm324, %v335, %v906
    %v915 = vsel %vm248, %v914, %v909
    %vm916 = vcmask 195584
    %v917 = vsel %vm916, %v915, %v912
    %919 = vrot.lane.b32.xlu0 %v572, 16
    %v920 = vpop.permute.xlu0 %919
    %923 = vrot.lane.b32.xlu0 %v737, 32
    %v924 = vpop.permute.xlu0 %923
    %927 = vrot.lane.b32.xlu0 %v902, 48
    %v928 = vpop.permute.xlu0 %927
    %v930 = vsel %vm248, %v406, %v920
    %vm931 = vcmask 261120
    %v932 = vsel %vm931, %v930, %v924
    %vm933 = vcmask 392192
    %v934 = vsel %vm933, %v932, %v928
    %v935 = vlaneseq
    %v936 = vshrl.u32 %v935, 7
    %v937 = vsub.s32 1, %v936
    %v938 = vrot.slane %v240, %v937
    %940 = vrot.lane.b32.xlu0 %v233, 64
    %v941 = vpop.permute.xlu0 %940
    %v943 = vsel %vm248, %v239, 0
    %v945 = vsel %vm248, %v941, 0
    %947 = vmatprep.subr.mxu0 0.0
    %948 = vmatpush1.xpose.msra.mxu0 0.0
    %949 = vmatprep.subr.mxu0 0.0
    %950 = vmatpush1.xpose.msra.mxu0 0.0
    %951 = vmatprep.subr.mxu0 0.0
    %952 = vmatpush1.xpose.msra.mxu0 0.0
    %953 = vmatprep.subr.mxu0 0.0
    %954 = vmatpush1.xpose.msra.mxu0 0.0
    %955 = vmatprep.subr.mxu0 0.0
    %956 = vmatpush1.xpose.msra.mxu0 0.0
    %957 = vmatprep.subr.mxu0 0.0
    %958 = vmatpush1.xpose.msra.mxu0 0.0
    %959 = vmatprep.subr.mxu0 0.0
    %960 = vmatpush1.xpose.msra.mxu0 0.0
    %961 = vmatprep.subr.mxu0 0.0
    %962 = vmatpush1.xpose.msra.mxu0 0.0
    %963 = vmatprep.subr.mxu0 0.0
    %964 = vmatpush1.xpose.msra.mxu0 0.0
    %965 = vmatprep.subr.mxu0 0.0
    %966 = vmatpush1.xpose.msra.mxu0 0.0
    %967 = vmatprep.subr.mxu0 0.0
    %968 = vmatpush1.xpose.msra.mxu0 0.0
    %969 = vmatprep.subr.mxu0 0.0
    %970 = vmatpush1.xpose.msra.mxu0 0.0
    %971 = vmatprep.subr.mxu0 0.0
    %972 = vmatpush1.xpose.msra.mxu0 0.0
    %973 = vmatprep.subr.mxu0 0.0
    %974 = vmatpush1.xpose.msra.mxu0 0.0
    %975 = vmatprep.subr.mxu0 0.0
    %976 = vmatpush1.xpose.msra.mxu0 0.0
    %977 = vmatprep.subr.mxu0 0.0
    %978 = vmatpush1.xpose.msra.mxu0 %v945
    %979 = vmatprep.subr.mxu0 0.0
    %980 = vmatpush2.xpose.msra.mxu0 0.0
    %981 = vmatprep.subr.mxu0 0.0
    %982 = vmatpush2.xpose.msra.mxu0 0.0
    %983 = vmatprep.subr.mxu0 0.0
    %984 = vmatpush2.xpose.msra.mxu0 0.0
    %985 = vmatprep.subr.mxu0 0.0
    %986 = vmatpush2.xpose.msra.mxu0 0.0
    %987 = vmatprep.subr.mxu0 0.0
    %988 = vmatpush2.xpose.msra.mxu0 0.0
    %989 = vmatprep.subr.mxu0 0.0
    %990 = vmatpush2.xpose.msra.mxu0 0.0
    %991 = vmatprep.subr.mxu0 0.0
    %992 = vmatpush2.xpose.msra.mxu0 0.0
    %993 = vmatprep.subr.mxu0 0.0
    %994 = vmatpush2.xpose.msra.mxu0 0.0
    %995 = vmatprep.subr.mxu0 0.0
    %996 = vmatpush2.xpose.msra.mxu0 0.0
    %997 = vmatprep.subr.mxu0 0.0
    %998 = vmatpush2.xpose.msra.mxu0 0.0
    %999 = vmatprep.subr.mxu0 0.0
    %1000 = vmatpush2.xpose.msra.mxu0 0.0
    %1001 = vmatprep.subr.mxu0 0.0
    %1002 = vmatpush2.xpose.msra.mxu0 0.0
    %1003 = vmatprep.subr.mxu0 0.0
    %1004 = vmatpush2.xpose.msra.mxu0 0.0
    %1005 = vmatprep.subr.mxu0 0.0
    %1006 = vmatpush2.xpose.msra.mxu0 0.0
    %1007 = vmatprep.subr.mxu0 0.0
    %1008 = vmatpush2.xpose.msra.mxu0 0.0
    %1009 = vmatprep.subr.mxu0 0.0
    %1010 = vmatpush2.xpose.msra.mxu0 0.0
    %1011 = vmatprep.mubr.f32.mxu0 0.0
    %1012 = vmatmul.mubr.f32.gmra.mxu0 %v943
    %v1013 = vpop.f32.mrf.mxu0
    %v1014 = vadd.f32 %v938, %v1013
    %v1015 = vpop.f32.mrf.mxu0
    %1016 = vdwg.mxu0
    %v1017 = vsel %vm324, %v1014, -inf
    %1018 = vmax.xlane.f32.xlu0 %v1017
    %v1019 = vpop.xlane.xlu0 %1018
    %v1020 = vsub.f32 %v1014, %v1019
    %v1021 = vmul.f32 %v1020, 1.442695
    %v1022 = vpow.pop %v1021
    %v1023 = vsel %vm324, %v1022, 0.0
    %1024 = vadd.xlane.f32.xlu0 %v1023
    %v1025 = vpop.xlane.xlu0 %1024
    %v1026 = vrcp.pop %v1025
    %v1027 = vmul.f32 %v1022, %v1026
    %v1029 = vsel %vm324, %v1027, 0
    %1031 = vmatprep.subr.mxu0 0.0
    %1032 = vmatpush1.msra.mxu0 0.0
    %1033 = vmatprep.subr.mxu0 0.0
    %1034 = vmatpush1.msra.mxu0 0.0
    %1035 = vmatprep.subr.mxu0 0.0
    %1036 = vmatpush1.msra.mxu0 0.0
    %1037 = vmatprep.subr.mxu0 0.0
    %1038 = vmatpush1.msra.mxu0 0.0
    %1039 = vmatprep.subr.mxu0 0.0
    %1040 = vmatpush1.msra.mxu0 0.0
    %1041 = vmatprep.subr.mxu0 0.0
    %1042 = vmatpush1.msra.mxu0 0.0
    %1043 = vmatprep.subr.mxu0 0.0
    %1044 = vmatpush1.msra.mxu0 0.0
    %1045 = vmatprep.subr.mxu0 0.0
    %1046 = vmatpush1.msra.mxu0 0.0
    %1047 = vmatprep.subr.mxu0 0.0
    %1048 = vmatpush1.msra.mxu0 0.0
    %1049 = vmatprep.subr.mxu0 0.0
    %1050 = vmatpush1.msra.mxu0 0.0
    %1051 = vmatprep.subr.mxu0 0.0
    %1052 = vmatpush1.msra.mxu0 0.0
    %1053 = vmatprep.subr.mxu0 0.0
    %1054 = vmatpush1.msra.mxu0 0.0
    %1055 = vmatprep.subr.mxu0 0.0
    %1056 = vmatpush1.msra.mxu0 0.0
    %1057 = vmatprep.subr.mxu0 0.0
    %1058 = vmatpush1.msra.mxu0 0.0
    %1059 = vmatprep.subr.mxu0 0.0
    %1060 = vmatpush1.msra.mxu0 0.0
    %1061 = vmatprep.subr.mxu0 0.0
    %1062 = vmatpush1.msra.mxu0 %v223
    %1063 = vmatprep.subr.mxu0 0.0
    %1064 = vmatpush2.msra.mxu0 0.0
    %1065 = vmatprep.subr.mxu0 0.0
    %1066 = vmatpush2.msra.mxu0 0.0
    %1067 = vmatprep.subr.mxu0 0.0
    %1068 = vmatpush2.msra.mxu0 0.0
    %1069 = vmatprep.subr.mxu0 0.0
    %1070 = vmatpush2.msra.mxu0 0.0
    %1071 = vmatprep.subr.mxu0 0.0
    %1072 = vmatpush2.msra.mxu0 0.0
    %1073 = vmatprep.subr.mxu0 0.0
    %1074 = vmatpush2.msra.mxu0 0.0
    %1075 = vmatprep.subr.mxu0 0.0
    %1076 = vmatpush2.msra.mxu0 0.0
    %1077 = vmatprep.subr.mxu0 0.0
    %1078 = vmatpush2.msra.mxu0 0.0
    %1079 = vmatprep.subr.mxu0 0.0
    %1080 = vmatpush2.msra.mxu0 0.0
    %1081 = vmatprep.subr.mxu0 0.0
    %1082 = vmatpush2.msra.mxu0 0.0
    %1083 = vmatprep.subr.mxu0 0.0
    %1084 = vmatpush2.msra.mxu0 0.0
    %1085 = vmatprep.subr.mxu0 0.0
    %1086 = vmatpush2.msra.mxu0 0.0
    %1087 = vmatprep.subr.mxu0 0.0
    %1088 = vmatpush2.msra.mxu0 0.0
    %1089 = vmatprep.subr.mxu0 0.0
    %1090 = vmatpush2.msra.mxu0 0.0
    %1091 = vmatprep.subr.mxu0 0.0
    %1092 = vmatpush2.msra.mxu0 0.0
    %1093 = vmatprep.subr.mxu0 0.0
    %1094 = vmatpush2.msra.mxu0 0.0
    %1095 = vmatprep.mubr.f32.mxu0 0.0
    %1096 = vmatmul.mubr.f32.gmra.mxu0 %v1029
    %v1097 = vpop.f32.mrf.mxu0
    %v1098 = vadd.f32 0.0, %v1097
    %v1099 = vpop.f32.mrf.mxu0
    %1100 = vdwg.mxu0
    %1101 = vrot.lane.b32.xlu0 %v239, 112
    %v1102 = vpop.permute.xlu0 %1101
    %1103 = vrot.lane.b32.xlu0 %v233, 48
    %v1104 = vpop.permute.xlu0 %1103
    %v1105 = vsel %vm248, %v1102, 0
    %v1107 = vsel %vm248, %v1104, 0
    %1109 = vmatprep.subr.mxu0 0.0
    %1110 = vmatpush1.xpose.msra.mxu0 0.0
    %1111 = vmatprep.subr.mxu0 0.0
    %1112 = vmatpush1.xpose.msra.mxu0 0.0
    %1113 = vmatprep.subr.mxu0 0.0
    %1114 = vmatpush1.xpose.msra.mxu0 0.0
    %1115 = vmatprep.subr.mxu0 0.0
    %1116 = vmatpush1.xpose.msra.mxu0 0.0
    %1117 = vmatprep.subr.mxu0 0.0
    %1118 = vmatpush1.xpose.msra.mxu0 0.0
    %1119 = vmatprep.subr.mxu0 0.0
    %1120 = vmatpush1.xpose.msra.mxu0 0.0
    %1121 = vmatprep.subr.mxu0 0.0
    %1122 = vmatpush1.xpose.msra.mxu0 0.0
    %1123 = vmatprep.subr.mxu0 0.0
    %1124 = vmatpush1.xpose.msra.mxu0 0.0
    %1125 = vmatprep.subr.mxu0 0.0
    %1126 = vmatpush1.xpose.msra.mxu0 0.0
    %1127 = vmatprep.subr.mxu0 0.0
    %1128 = vmatpush1.xpose.msra.mxu0 0.0
    %1129 = vmatprep.subr.mxu0 0.0
    %1130 = vmatpush1.xpose.msra.mxu0 0.0
    %1131 = vmatprep.subr.mxu0 0.0
    %1132 = vmatpush1.xpose.msra.mxu0 0.0
    %1133 = vmatprep.subr.mxu0 0.0
    %1134 = vmatpush1.xpose.msra.mxu0 0.0
    %1135 = vmatprep.subr.mxu0 0.0
    %1136 = vmatpush1.xpose.msra.mxu0 0.0
    %1137 = vmatprep.subr.mxu0 0.0
    %1138 = vmatpush1.xpose.msra.mxu0 0.0
    %1139 = vmatprep.subr.mxu0 0.0
    %1140 = vmatpush1.xpose.msra.mxu0 %v1107
    %1141 = vmatprep.subr.mxu0 0.0
    %1142 = vmatpush2.xpose.msra.mxu0 0.0
    %1143 = vmatprep.subr.mxu0 0.0
    %1144 = vmatpush2.xpose.msra.mxu0 0.0
    %1145 = vmatprep.subr.mxu0 0.0
    %1146 = vmatpush2.xpose.msra.mxu0 0.0
    %1147 = vmatprep.subr.mxu0 0.0
    %1148 = vmatpush2.xpose.msra.mxu0 0.0
    %1149 = vmatprep.subr.mxu0 0.0
    %1150 = vmatpush2.xpose.msra.mxu0 0.0
    %1151 = vmatprep.subr.mxu0 0.0
    %1152 = vmatpush2.xpose.msra.mxu0 0.0
    %1153 = vmatprep.subr.mxu0 0.0
    %1154 = vmatpush2.xpose.msra.mxu0 0.0
    %1155 = vmatprep.subr.mxu0 0.0
    %1156 = vmatpush2.xpose.msra.mxu0 0.0
    %1157 = vmatprep.subr.mxu0 0.0
    %1158 = vmatpush2.xpose.msra.mxu0 0.0
    %1159 = vmatprep.subr.mxu0 0.0
    %1160 = vmatpush2.xpose.msra.mxu0 0.0
    %1161 = vmatprep.subr.mxu0 0.0
    %1162 = vmatpush2.xpose.msra.mxu0 0.0
    %1163 = vmatprep.subr.mxu0 0.0
    %1164 = vmatpush2.xpose.msra.mxu0 0.0
    %1165 = vmatprep.subr.mxu0 0.0
    %1166 = vmatpush2.xpose.msra.mxu0 0.0
    %1167 = vmatprep.subr.mxu0 0.0
    %1168 = vmatpush2.xpose.msra.mxu0 0.0
    %1169 = vmatprep.subr.mxu0 0.0
    %1170 = vmatpush2.xpose.msra.mxu0 0.0
    %1171 = vmatprep.subr.mxu0 0.0
    %1172 = vmatpush2.xpose.msra.mxu0 0.0
    %1173 = vmatprep.mubr.f32.mxu0 0.0
    %1174 = vmatmul.mubr.f32.gmra.mxu0 %v1105
    %v1175 = vpop.f32.mrf.mxu0
    %v1176 = vadd.f32 %v938, %v1175
    %v1177 = vpop.f32.mrf.mxu0
    %1178 = vdwg.mxu0
    %v1179 = vsel %vm324, %v1176, -inf
    %1180 = vmax.xlane.f32.xlu0 %v1179
    %v1181 = vpop.xlane.xlu0 %1180
    %v1182 = vsub.f32 %v1176, %v1181
    %v1183 = vmul.f32 %v1182, 1.442695
    %v1184 = vpow.pop %v1183
    %v1185 = vsel %vm324, %v1184, 0.0
    %1186 = vadd.xlane.f32.xlu0 %v1185
    %v1187 = vpop.xlane.xlu0 %1186
    %v1188 = vrcp.pop %v1187
    %v1189 = vmul.f32 %v1184, %v1188
    %1191 = vrot.lane.b32.xlu0 %v223, 112
    %v1192 = vpop.permute.xlu0 %1191
    %v1195 = vsel %vm324, %v1189, 0
    %1197 = vmatprep.subr.mxu0 0.0
    %1198 = vmatpush1.msra.mxu0 0.0
    %1199 = vmatprep.subr.mxu0 0.0
    %1200 = vmatpush1.msra.mxu0 0.0
    %1201 = vmatprep.subr.mxu0 0.0
    %1202 = vmatpush1.msra.mxu0 0.0
    %1203 = vmatprep.subr.mxu0 0.0
    %1204 = vmatpush1.msra.mxu0 0.0
    %1205 = vmatprep.subr.mxu0 0.0
    %1206 = vmatpush1.msra.mxu0 0.0
    %1207 = vmatprep.subr.mxu0 0.0
    %1208 = vmatpush1.msra.mxu0 0.0
    %1209 = vmatprep.subr.mxu0 0.0
    %1210 = vmatpush1.msra.mxu0 0.0
    %1211 = vmatprep.subr.mxu0 0.0
    %1212 = vmatpush1.msra.mxu0 0.0
    %1213 = vmatprep.subr.mxu0 0.0
    %1214 = vmatpush1.msra.mxu0 0.0
    %1215 = vmatprep.subr.mxu0 0.0
    %1216 = vmatpush1.msra.mxu0 0.0
    %1217 = vmatprep.subr.mxu0 0.0
    %1218 = vmatpush1.msra.mxu0 0.0
    %1219 = vmatprep.subr.mxu0 0.0
    %1220 = vmatpush1.msra.mxu0 0.0
    %1221 = vmatprep.subr.mxu0 0.0
    %1222 = vmatpush1.msra.mxu0 0.0
    %1223 = vmatprep.subr.mxu0 0.0
    %1224 = vmatpush1.msra.mxu0 0.0
    %1225 = vmatprep.subr.mxu0 0.0
    %1226 = vmatpush1.msra.mxu0 0.0
    %1227 = vmatprep.subr.mxu0 0.0
    %1228 = vmatpush1.msra.mxu0 %v1192
    %1229 = vmatprep.subr.mxu0 0.0
    %1230 = vmatpush2.msra.mxu0 0.0
    %1231 = vmatprep.subr.mxu0 0.0
    %1232 = vmatpush2.msra.mxu0 0.0
    %1233 = vmatprep.subr.mxu0 0.0
    %1234 = vmatpush2.msra.mxu0 0.0
    %1235 = vmatprep.subr.mxu0 0.0
    %1236 = vmatpush2.msra.mxu0 0.0
    %1237 = vmatprep.subr.mxu0 0.0
    %1238 = vmatpush2.msra.mxu0 0.0
    %1239 = vmatprep.subr.mxu0 0.0
    %1240 = vmatpush2.msra.mxu0 0.0
    %1241 = vmatprep.subr.mxu0 0.0
    %1242 = vmatpush2.msra.mxu0 0.0
    %1243 = vmatprep.subr.mxu0 0.0
    %1244 = vmatpush2.msra.mxu0 0.0
    %1245 = vmatprep.subr.mxu0 0.0
    %1246 = vmatpush2.msra.mxu0 0.0
    %1247 = vmatprep.subr.mxu0 0.0
    %1248 = vmatpush2.msra.mxu0 0.0
    %1249 = vmatprep.subr.mxu0 0.0
    %1250 = vmatpush2.msra.mxu0 0.0
    %1251 = vmatprep.subr.mxu0 0.0
    %1252 = vmatpush2.msra.mxu0 0.0
    %1253 = vmatprep.subr.mxu0 0.0
    %1254 = vmatpush2.msra.mxu0 0.0
    %1255 = vmatprep.subr.mxu0 0.0
    %1256 = vmatpush2.msra.mxu0 0.0
    %1257 = vmatprep.subr.mxu0 0.0
    %1258 = vmatpush2.msra.mxu0 0.0
    %1259 = vmatprep.subr.mxu0 0.0
    %1260 = vmatpush2.msra.mxu0 0.0
    %1261 = vmatprep.mubr.f32.mxu0 0.0
    %1262 = vmatmul.mubr.f32.gmra.mxu0 %v1195
    %v1263 = vpop.f32.mrf.mxu0
    %v1264 = vadd.f32 0.0, %v1263
    %v1265 = vpop.f32.mrf.mxu0
    %1266 = vdwg.mxu0
    %1267 = vrot.lane.b32.xlu0 %v239, 96
    %v1268 = vpop.permute.xlu0 %1267
    %1269 = vrot.lane.b32.xlu0 %v233, 32
    %v1270 = vpop.permute.xlu0 %1269
    %v1271 = vsel %vm248, %v1268, 0
    %v1273 = vsel %vm248, %v1270, 0
    %1275 = vmatprep.subr.mxu0 0.0
    %1276 = vmatpush1.xpose.msra.mxu0 0.0
    %1277 = vmatprep.subr.mxu0 0.0
    %1278 = vmatpush1.xpose.msra.mxu0 0.0
    %1279 = vmatprep.subr.mxu0 0.0
    %1280 = vmatpush1.xpose.msra.mxu0 0.0
    %1281 = vmatprep.subr.mxu0 0.0
    %1282 = vmatpush1.xpose.msra.mxu0 0.0
    %1283 = vmatprep.subr.mxu0 0.0
    %1284 = vmatpush1.xpose.msra.mxu0 0.0
    %1285 = vmatprep.subr.mxu0 0.0
    %1286 = vmatpush1.xpose.msra.mxu0 0.0
    %1287 = vmatprep.subr.mxu0 0.0
    %1288 = vmatpush1.xpose.msra.mxu0 0.0
    %1289 = vmatprep.subr.mxu0 0.0
    %1290 = vmatpush1.xpose.msra.mxu0 0.0
    %1291 = vmatprep.subr.mxu0 0.0
    %1292 = vmatpush1.xpose.msra.mxu0 0.0
    %1293 = vmatprep.subr.mxu0 0.0
    %1294 = vmatpush1.xpose.msra.mxu0 0.0
    %1295 = vmatprep.subr.mxu0 0.0
    %1296 = vmatpush1.xpose.msra.mxu0 0.0
    %1297 = vmatprep.subr.mxu0 0.0
    %1298 = vmatpush1.xpose.msra.mxu0 0.0
    %1299 = vmatprep.subr.mxu0 0.0
    %1300 = vmatpush1.xpose.msra.mxu0 0.0
    %1301 = vmatprep.subr.mxu0 0.0
    %1302 = vmatpush1.xpose.msra.mxu0 0.0
    %1303 = vmatprep.subr.mxu0 0.0
    %1304 = vmatpush1.xpose.msra.mxu0 0.0
    %1305 = vmatprep.subr.mxu0 0.0
    %1306 = vmatpush1.xpose.msra.mxu0 %v1273
    %1307 = vmatprep.subr.mxu0 0.0
    %1308 = vmatpush2.xpose.msra.mxu0 0.0
    %1309 = vmatprep.subr.mxu0 0.0
    %1310 = vmatpush2.xpose.msra.mxu0 0.0
    %1311 = vmatprep.subr.mxu0 0.0
    %1312 = vmatpush2.xpose.msra.mxu0 0.0
    %1313 = vmatprep.subr.mxu0 0.0
    %1314 = vmatpush2.xpose.msra.mxu0 0.0
    %1315 = vmatprep.subr.mxu0 0.0
    %1316 = vmatpush2.xpose.msra.mxu0 0.0
    %1317 = vmatprep.subr.mxu0 0.0
    %1318 = vmatpush2.xpose.msra.mxu0 0.0
    %1319 = vmatprep.subr.mxu0 0.0
    %1320 = vmatpush2.xpose.msra.mxu0 0.0
    %1321 = vmatprep.subr.mxu0 0.0
    %1322 = vmatpush2.xpose.msra.mxu0 0.0
    %1323 = vmatprep.subr.mxu0 0.0
    %1324 = vmatpush2.xpose.msra.mxu0 0.0
    %1325 = vmatprep.subr.mxu0 0.0
    %1326 = vmatpush2.xpose.msra.mxu0 0.0
    %1327 = vmatprep.subr.mxu0 0.0
    %1328 = vmatpush2.xpose.msra.mxu0 0.0
    %1329 = vmatprep.subr.mxu0 0.0
    %1330 = vmatpush2.xpose.msra.mxu0 0.0
    %1331 = vmatprep.subr.mxu0 0.0
    %1332 = vmatpush2.xpose.msra.mxu0 0.0
    %1333 = vmatprep.subr.mxu0 0.0
    %1334 = vmatpush2.xpose.msra.mxu0 0.0
    %1335 = vmatprep.subr.mxu0 0.0
    %1336 = vmatpush2.xpose.msra.mxu0 0.0
    %1337 = vmatprep.subr.mxu0 0.0
    %1338 = vmatpush2.xpose.msra.mxu0 0.0
    %1339 = vmatprep.mubr.f32.mxu0 0.0
    %1340 = vmatmul.mubr.f32.gmra.mxu0 %v1271
    %v1341 = vpop.f32.mrf.mxu0
    %v1342 = vadd.f32 %v938, %v1341
    %v1343 = vpop.f32.mrf.mxu0
    %1344 = vdwg.mxu0
    %v1345 = vsel %vm324, %v1342, -inf
    %1346 = vmax.xlane.f32.xlu0 %v1345
    %v1347 = vpop.xlane.xlu0 %1346
    %v1348 = vsub.f32 %v1342, %v1347
    %v1349 = vmul.f32 %v1348, 1.442695
    %v1350 = vpow.pop %v1349
    %v1351 = vsel %vm324, %v1350, 0.0
    %1352 = vadd.xlane.f32.xlu0 %v1351
    %v1353 = vpop.xlane.xlu0 %1352
    %v1354 = vrcp.pop %v1353
    %v1355 = vmul.f32 %v1350, %v1354
    %1356 = vrot.lane.b32.xlu0 %v223, 96
    %v1357 = vpop.permute.xlu0 %1356
    %v1360 = vsel %vm324, %v1355, 0
    %1362 = vmatprep.subr.mxu0 0.0
    %1363 = vmatpush1.msra.mxu0 0.0
    %1364 = vmatprep.subr.mxu0 0.0
    %1365 = vmatpush1.msra.mxu0 0.0
    %1366 = vmatprep.subr.mxu0 0.0
    %1367 = vmatpush1.msra.mxu0 0.0
    %1368 = vmatprep.subr.mxu0 0.0
    %1369 = vmatpush1.msra.mxu0 0.0
    %1370 = vmatprep.subr.mxu0 0.0
    %1371 = vmatpush1.msra.mxu0 0.0
    %1372 = vmatprep.subr.mxu0 0.0
    %1373 = vmatpush1.msra.mxu0 0.0
    %1374 = vmatprep.subr.mxu0 0.0
    %1375 = vmatpush1.msra.mxu0 0.0
    %1376 = vmatprep.subr.mxu0 0.0
    %1377 = vmatpush1.msra.mxu0 0.0
    %1378 = vmatprep.subr.mxu0 0.0
    %1379 = vmatpush1.msra.mxu0 0.0
    %1380 = vmatprep.subr.mxu0 0.0
    %1381 = vmatpush1.msra.mxu0 0.0
    %1382 = vmatprep.subr.mxu0 0.0
    %1383 = vmatpush1.msra.mxu0 0.0
    %1384 = vmatprep.subr.mxu0 0.0
    %1385 = vmatpush1.msra.mxu0 0.0
    %1386 = vmatprep.subr.mxu0 0.0
    %1387 = vmatpush1.msra.mxu0 0.0
    %1388 = vmatprep.subr.mxu0 0.0
    %1389 = vmatpush1.msra.mxu0 0.0
    %1390 = vmatprep.subr.mxu0 0.0
    %1391 = vmatpush1.msra.mxu0 0.0
    %1392 = vmatprep.subr.mxu0 0.0
    %1393 = vmatpush1.msra.mxu0 %v1357
    %1394 = vmatprep.subr.mxu0 0.0
    %1395 = vmatpush2.msra.mxu0 0.0
    %1396 = vmatprep.subr.mxu0 0.0
    %1397 = vmatpush2.msra.mxu0 0.0
    %1398 = vmatprep.subr.mxu0 0.0
    %1399 = vmatpush2.msra.mxu0 0.0
    %1400 = vmatprep.subr.mxu0 0.0
    %1401 = vmatpush2.msra.mxu0 0.0
    %1402 = vmatprep.subr.mxu0 0.0
    %1403 = vmatpush2.msra.mxu0 0.0
    %1404 = vmatprep.subr.mxu0 0.0
    %1405 = vmatpush2.msra.mxu0 0.0
    %1406 = vmatprep.subr.mxu0 0.0
    %1407 = vmatpush2.msra.mxu0 0.0
    %1408 = vmatprep.subr.mxu0 0.0
    %1409 = vmatpush2.msra.mxu0 0.0
    %1410 = vmatprep.subr.mxu0 0.0
    %1411 = vmatpush2.msra.mxu0 0.0
    %1412 = vmatprep.subr.mxu0 0.0
    %1413 = vmatpush2.msra.mxu0 0.0
    %1414 = vmatprep.subr.mxu0 0.0
    %1415 = vmatpush2.msra.mxu0 0.0
    %1416 = vmatprep.subr.mxu0 0.0
    %1417 = vmatpush2.msra.mxu0 0.0
    %1418 = vmatprep.subr.mxu0 0.0
    %1419 = vmatpush2.msra.mxu0 0.0
    %1420 = vmatprep.subr.mxu0 0.0
    %1421 = vmatpush2.msra.mxu0 0.0
    %1422 = vmatprep.subr.mxu0 0.0
    %1423 = vmatpush2.msra.mxu0 0.0
    %1424 = vmatprep.subr.mxu0 0.0
    %1425 = vmatpush2.msra.mxu0 0.0
    %1426 = vmatprep.mubr.f32.mxu0 0.0
    %1427 = vmatmul.mubr.f32.gmra.mxu0 %v1360
    %v1428 = vpop.f32.mrf.mxu0
    %v1429 = vadd.f32 0.0, %v1428
    %v1430 = vpop.f32.mrf.mxu0
    %1431 = vdwg.mxu0
    %1432 = vrot.lane.b32.xlu0 %v239, 80
    %v1433 = vpop.permute.xlu0 %1432
    %1434 = vrot.lane.b32.xlu0 %v233, 16
    %v1435 = vpop.permute.xlu0 %1434
    %v1436 = vsel %vm248, %v1433, 0
    %v1438 = vsel %vm248, %v1435, 0
    %1440 = vmatprep.subr.mxu0 0.0
    %1441 = vmatpush1.xpose.msra.mxu0 0.0
    %1442 = vmatprep.subr.mxu0 0.0
    %1443 = vmatpush1.xpose.msra.mxu0 0.0
    %1444 = vmatprep.subr.mxu0 0.0
    %1445 = vmatpush1.xpose.msra.mxu0 0.0
    %1446 = vmatprep.subr.mxu0 0.0
    %1447 = vmatpush1.xpose.msra.mxu0 0.0
    %1448 = vmatprep.subr.mxu0 0.0
    %1449 = vmatpush1.xpose.msra.mxu0 0.0
    %1450 = vmatprep.subr.mxu0 0.0
    %1451 = vmatpush1.xpose.msra.mxu0 0.0
    %1452 = vmatprep.subr.mxu0 0.0
    %1453 = vmatpush1.xpose.msra.mxu0 0.0
    %1454 = vmatprep.subr.mxu0 0.0
    %1455 = vmatpush1.xpose.msra.mxu0 0.0
    %1456 = vmatprep.subr.mxu0 0.0
    %1457 = vmatpush1.xpose.msra.mxu0 0.0
    %1458 = vmatprep.subr.mxu0 0.0
    %1459 = vmatpush1.xpose.msra.mxu0 0.0
    %1460 = vmatprep.subr.mxu0 0.0
    %1461 = vmatpush1.xpose.msra.mxu0 0.0
    %1462 = vmatprep.subr.mxu0 0.0
    %1463 = vmatpush1.xpose.msra.mxu0 0.0
    %1464 = vmatprep.subr.mxu0 0.0
    %1465 = vmatpush1.xpose.msra.mxu0 0.0
    %1466 = vmatprep.subr.mxu0 0.0
    %1467 = vmatpush1.xpose.msra.mxu0 0.0
    %1468 = vmatprep.subr.mxu0 0.0
    %1469 = vmatpush1.xpose.msra.mxu0 0.0
    %1470 = vmatprep.subr.mxu0 0.0
    %1471 = vmatpush1.xpose.msra.mxu0 %v1438
    %1472 = vmatprep.subr.mxu0 0.0
    %1473 = vmatpush2.xpose.msra.mxu0 0.0
    %1474 = vmatprep.subr.mxu0 0.0
    %1475 = vmatpush2.xpose.msra.mxu0 0.0
    %1476 = vmatprep.subr.mxu0 0.0
    %1477 = vmatpush2.xpose.msra.mxu0 0.0
    %1478 = vmatprep.subr.mxu0 0.0
    %1479 = vmatpush2.xpose.msra.mxu0 0.0
    %1480 = vmatprep.subr.mxu0 0.0
    %1481 = vmatpush2.xpose.msra.mxu0 0.0
    %1482 = vmatprep.subr.mxu0 0.0
    %1483 = vmatpush2.xpose.msra.mxu0 0.0
    %1484 = vmatprep.subr.mxu0 0.0
    %1485 = vmatpush2.xpose.msra.mxu0 0.0
    %1486 = vmatprep.subr.mxu0 0.0
    %1487 = vmatpush2.xpose.msra.mxu0 0.0
    %1488 = vmatprep.subr.mxu0 0.0
    %1489 = vmatpush2.xpose.msra.mxu0 0.0
    %1490 = vmatprep.subr.mxu0 0.0
    %1491 = vmatpush2.xpose.msra.mxu0 0.0
    %1492 = vmatprep.subr.mxu0 0.0
    %1493 = vmatpush2.xpose.msra.mxu0 0.0
    %1494 = vmatprep.subr.mxu0 0.0
    %1495 = vmatpush2.xpose.msra.mxu0 0.0
    %1496 = vmatprep.subr.mxu0 0.0
    %1497 = vmatpush2.xpose.msra.mxu0 0.0
    %1498 = vmatprep.subr.mxu0 0.0
    %1499 = vmatpush2.xpose.msra.mxu0 0.0
    %1500 = vmatprep.subr.mxu0 0.0
    %1501 = vmatpush2.xpose.msra.mxu0 0.0
    %1502 = vmatprep.subr.mxu0 0.0
    %1503 = vmatpush2.xpose.msra.mxu0 0.0
    %1504 = vmatprep.mubr.f32.mxu0 0.0
    %1505 = vmatmul.mubr.f32.gmra.mxu0 %v1436
    %v1506 = vpop.f32.mrf.mxu0
    %v1507 = vadd.f32 %v938, %v1506
    %v1508 = vpop.f32.mrf.mxu0
    %1509 = vdwg.mxu0
    %v1510 = vsel %vm324, %v1507, -inf
    %1511 = vmax.xlane.f32.xlu0 %v1510
    %v1512 = vpop.xlane.xlu0 %1511
    %v1513 = vsub.f32 %v1507, %v1512
    %v1514 = vmul.f32 %v1513, 1.442695
    %v1515 = vpow.pop %v1514
    %v1516 = vsel %vm324, %v1515, 0.0
    %1517 = vadd.xlane.f32.xlu0 %v1516
    %v1518 = vpop.xlane.xlu0 %1517
    %v1519 = vrcp.pop %v1518
    %v1520 = vmul.f32 %v1515, %v1519
    %1521 = vrot.lane.b32.xlu0 %v223, 80
    %v1522 = vpop.permute.xlu0 %1521
    %v1525 = vsel %vm324, %v1520, 0
    %1527 = vmatprep.subr.mxu0 0.0
    %1528 = vmatpush1.msra.mxu0 0.0
    %1529 = vmatprep.subr.mxu0 0.0
    %1530 = vmatpush1.msra.mxu0 0.0
    %1531 = vmatprep.subr.mxu0 0.0
    %1532 = vmatpush1.msra.mxu0 0.0
    %1533 = vmatprep.subr.mxu0 0.0
    %1534 = vmatpush1.msra.mxu0 0.0
    %1535 = vmatprep.subr.mxu0 0.0
    %1536 = vmatpush1.msra.mxu0 0.0
    %1537 = vmatprep.subr.mxu0 0.0
    %1538 = vmatpush1.msra.mxu0 0.0
    %1539 = vmatprep.subr.mxu0 0.0
    %1540 = vmatpush1.msra.mxu0 0.0
    %1541 = vmatprep.subr.mxu0 0.0
    %1542 = vmatpush1.msra.mxu0 0.0
    %1543 = vmatprep.subr.mxu0 0.0
    %1544 = vmatpush1.msra.mxu0 0.0
    %1545 = vmatprep.subr.mxu0 0.0
    %1546 = vmatpush1.msra.mxu0 0.0
    %1547 = vmatprep.subr.mxu0 0.0
    %1548 = vmatpush1.msra.mxu0 0.0
    %1549 = vmatprep.subr.mxu0 0.0
    %1550 = vmatpush1.msra.mxu0 0.0
    %1551 = vmatprep.subr.mxu0 0.0
    %1552 = vmatpush1.msra.mxu0 0.0
    %1553 = vmatprep.subr.mxu0 0.0
    %1554 = vmatpush1.msra.mxu0 0.0
    %1555 = vmatprep.subr.mxu0 0.0
    %1556 = vmatpush1.msra.mxu0 0.0
    %1557 = vmatprep.subr.mxu0 0.0
    %1558 = vmatpush1.msra.mxu0 %v1522
    %1559 = vmatprep.subr.mxu0 0.0
    %1560 = vmatpush2.msra.mxu0 0.0
    %1561 = vmatprep.subr.mxu0 0.0
    %1562 = vmatpush2.msra.mxu0 0.0
    %1563 = vmatprep.subr.mxu0 0.0
    %1564 = vmatpush2.msra.mxu0 0.0
    %1565 = vmatprep.subr.mxu0 0.0
    %1566 = vmatpush2.msra.mxu0 0.0
    %1567 = vmatprep.subr.mxu0 0.0
    %1568 = vmatpush2.msra.mxu0 0.0
    %1569 = vmatprep.subr.mxu0 0.0
    %1570 = vmatpush2.msra.mxu0 0.0
    %1571 = vmatprep.subr.mxu0 0.0
    %1572 = vmatpush2.msra.mxu0 0.0
    %1573 = vmatprep.subr.mxu0 0.0
    %1574 = vmatpush2.msra.mxu0 0.0
    %1575 = vmatprep.subr.mxu0 0.0
    %1576 = vmatpush2.msra.mxu0 0.0
    %1577 = vmatprep.subr.mxu0 0.0
    %1578 = vmatpush2.msra.mxu0 0.0
    %1579 = vmatprep.subr.mxu0 0.0
    %1580 = vmatpush2.msra.mxu0 0.0
    %1581 = vmatprep.subr.mxu0 0.0
    %1582 = vmatpush2.msra.mxu0 0.0
    %1583 = vmatprep.subr.mxu0 0.0
    %1584 = vmatpush2.msra.mxu0 0.0
    %1585 = vmatprep.subr.mxu0 0.0
    %1586 = vmatpush2.msra.mxu0 0.0
    %1587 = vmatprep.subr.mxu0 0.0
    %1588 = vmatpush2.msra.mxu0 0.0
    %1589 = vmatprep.subr.mxu0 0.0
    %1590 = vmatpush2.msra.mxu0 0.0
    %1591 = vmatprep.mubr.f32.mxu0 0.0
    %1592 = vmatmul.mubr.f32.gmra.mxu0 %v1525
    %v1593 = vpop.f32.mrf.mxu0
    %v1594 = vadd.f32 0.0, %v1593
    %v1595 = vpop.f32.mrf.mxu0
    %1596 = vdwg.mxu0
    %1597 = vrot.lane.b32.xlu0 %v1189, 8
    %v1598 = vpop.permute.xlu0 %1597
    %1600 = vrot.lane.b32.xlu0 %v1355, 16
    %v1601 = vpop.permute.xlu0 %1600
    %1603 = vrot.lane.b32.xlu0 %v1520, 24
    %v1604 = vpop.permute.xlu0 %1603
    %v1606 = vsel %vm324, %v1027, %v1598
    %v1607 = vsel %vm248, %v1606, %v1601
    %v1608 = vsel %vm916, %v1607, %v1604
    %1610 = vrot.lane.b32.xlu0 %v1264, 16
    %v1611 = vpop.permute.xlu0 %1610
    %1614 = vrot.lane.b32.xlu0 %v1429, 32
    %v1615 = vpop.permute.xlu0 %1614
    %1618 = vrot.lane.b32.xlu0 %v1594, 48
    %v1619 = vpop.permute.xlu0 %1618
    %v1621 = vsel %vm248, %v1098, %v1611
    %v1622 = vsel %vm931, %v1621, %v1615
    %v1623 = vsel %vm933, %v1622, %v1619
    %1624 = vst.msk [vmem:[%s7] sm:$0xff] %vm931, %v917
    %1625 = vst.msk [vmem:[%s7 + $0x8] sm:$0xff] %vm931, %v1608
    %v1626 = vld [vmem:[#allocation8 + $0x8] sm:$0xff]
    %v1627 = vld [vmem:[#allocation8 + $0x18] sm:$0xff]
    %v1628 = vld [vmem:[#allocation8 + $0x28] sm:$0xff]
    %v1629 = vld [vmem:[#allocation8 + $0x38] sm:$0xff]
    %v1630 = vld [vmem:[#allocation8 + $0x48] sm:$0xff]
    %v1631 = vld [vmem:[#allocation8 + $0x58] sm:$0xff]
    %v1632 = vld [vmem:[#allocation8 + $0x68] sm:$0xff]
    %v1633 = vld [vmem:[#allocation8 + $0x78] sm:$0xff]
    %v1634 = vlaneseq
    %v1635 = vshrl.u32 %v1634, 7
    %v1636 = vsub.s32 3, %v1635
    %v1637 = vrot.slane %v81, %v1636
    %1646 = vrot.lane.b32.xlu0 %v1626, 64
    %v1647 = vpop.permute.xlu0 %1646
    %1648 = vrot.lane.b32.xlu0 %v1627, 64
    %v1649 = vpop.permute.xlu0 %1648
    %1650 = vrot.lane.b32.xlu0 %v1628, 64
    %v1651 = vpop.permute.xlu0 %1650
    %1652 = vrot.lane.b32.xlu0 %v1629, 64
    %v1653 = vpop.permute.xlu0 %1652
    %1654 = vrot.lane.b32.xlu0 %v1630, 64
    %v1655 = vpop.permute.xlu0 %1654
    %1656 = vrot.lane.b32.xlu0 %v1631, 64
    %v1657 = vpop.permute.xlu0 %1656
    %1658 = vrot.lane.b32.xlu0 %v1632, 64
    %v1659 = vpop.permute.xlu0 %1658
    %1660 = vrot.lane.b32.xlu0 %v1633, 64
    %v1661 = vpop.permute.xlu0 %1660
    %v1671 = vsel %vm104, %v934, 0
    %v1674 = vsel %vm104, %v1623, 0
    %1676 = vmatprep.subr.mxu0 0.0
    %1677 = vmatpush1.msra.mxu0 0.0
    %1678 = vmatprep.subr.mxu0 0.0
    %1679 = vmatpush1.msra.mxu0 0.0
    %1680 = vmatprep.subr.mxu0 0.0
    %1681 = vmatpush1.msra.mxu0 0.0
    %1682 = vmatprep.subr.mxu0 0.0
    %1683 = vmatpush1.msra.mxu0 0.0
    %1684 = vmatprep.subr.mxu0 0.0
    %1685 = vmatpush1.msra.mxu0 0.0
    %1686 = vmatprep.subr.mxu0 0.0
    %1687 = vmatpush1.msra.mxu0 0.0
    %1688 = vmatprep.subr.mxu0 0.0
    %1689 = vmatpush1.msra.mxu0 0.0
    %1690 = vmatprep.subr.mxu0 0.0
    %1691 = vmatpush1.msra.mxu0 0.0
    %1692 = vmatprep.subr.mxu0 0.0
    %1693 = vmatpush1.msra.mxu0 %v1661
    %1694 = vmatprep.subr.mxu0 0.0
    %1695 = vmatpush1.msra.mxu0 %v1659
    %1696 = vmatprep.subr.mxu0 0.0
    %1697 = vmatpush1.msra.mxu0 %v1657
    %1698 = vmatprep.subr.mxu0 0.0
    %1699 = vmatpush1.msra.mxu0 %v1655
    %1700 = vmatprep.subr.mxu0 0.0
    %1701 = vmatpush1.msra.mxu0 %v1653
    %1702 = vmatprep.subr.mxu0 0.0
    %1703 = vmatpush1.msra.mxu0 %v1651
    %1704 = vmatprep.subr.mxu0 0.0
    %1705 = vmatpush1.msra.mxu0 %v1649
    %1706 = vmatprep.subr.mxu0 0.0
    %1707 = vmatpush1.msra.mxu0 %v1647
    %1708 = vmatprep.subr.mxu0 0.0
    %1709 = vmatpush2.msra.mxu0 0.0
    %1710 = vmatprep.subr.mxu0 0.0
    %1711 = vmatpush2.msra.mxu0 0.0
    %1712 = vmatprep.subr.mxu0 0.0
    %1713 = vmatpush2.msra.mxu0 0.0
    %1714 = vmatprep.subr.mxu0 0.0
    %1715 = vmatpush2.msra.mxu0 0.0
    %1716 = vmatprep.subr.mxu0 0.0
    %1717 = vmatpush2.msra.mxu0 0.0
    %1718 = vmatprep.subr.mxu0 0.0
    %1719 = vmatpush2.msra.mxu0 0.0
    %1720 = vmatprep.subr.mxu0 0.0
    %1721 = vmatpush2.msra.mxu0 0.0
    %1722 = vmatprep.subr.mxu0 0.0
    %1723 = vmatpush2.msra.mxu0 0.0
    %1724 = vmatprep.subr.mxu0 0.0
    %1725 = vmatpush2.msra.mxu0 0.0
    %1726 = vmatprep.subr.mxu0 0.0
    %1727 = vmatpush2.msra.mxu0 0.0
    %1728 = vmatprep.subr.mxu0 0.0
    %1729 = vmatpush2.msra.mxu0 0.0
    %1730 = vmatprep.subr.mxu0 0.0
    %1731 = vmatpush2.msra.mxu0 0.0
    %1732 = vmatprep.subr.mxu0 0.0
    %1733 = vmatpush2.msra.mxu0 0.0
    %1734 = vmatprep.subr.mxu0 0.0
    %1735 = vmatpush2.msra.mxu0 0.0
    %1736 = vmatprep.subr.mxu0 0.0
    %1737 = vmatpush2.msra.mxu0 0.0
    %1738 = vmatprep.subr.mxu0 0.0
    %1739 = vmatpush2.msra.mxu0 0.0
    %1740 = vmatprep.mubr.f32.mxu0 0.0
    %1741 = vmatmul.mubr.f32.gmra.mxu0 %v1671
    %v1742 = vpop.f32.mrf.mxu0
    %v1743 = vadd.f32 %v1637, %v1742
    %v1744 = vpop.f32.mrf.mxu0
    %1745 = vmatprep.mubr.f32.mxu0 0.0
    %1746 = vmatmul.mubr.f32.gmra.mxu0 %v1674
    %v1747 = vpop.f32.mrf.mxu0
    %v1748 = vadd.f32 %v1637, %v1747
    %v1749 = vpop.f32.mrf.mxu0
    %1750 = vdwg.mxu0
    %1751 = vst.msk [vmem:[#allocation10] sm:$0xff] %vm104, %v1743
    %1752 = vst.msk [vmem:[#allocation10 + $0x8] sm:$0xff] %vm104, %v1748
    // Predicated region
    $region42: #{mhatt_forward.1} parent=1 // pred_check
      _
    $region43: #{mhatt_forward.1} parent=1 // pred_check_branch
      %1754 = sbr.rel (0) target = $region45
    $region44: #{mhatt_forward.1} parent=1 // pred_region
      %s1756 = ssub.s32 256, 256
      %1757 = vsyncadd [#allocation4], %s1756
      %s1758 = sshll.u32 [#allocation10], 4
      %s1759 = int_to_ptr.vmem [resolvable:$true] %s1758
      %1764 = dma.vmem_to_hbm [thread:$0]  %s1759, 256, %s6, [#allocation4], 128, 128, 8
    $region45: #{mhatt_forward.1} parent=1 // pred_fallthru
      _
    // Predicated region
    $region46: #{mhatt_forward.1} parent=1 // pred_check
      _
    $region47: #{mhatt_forward.1} parent=1 // pred_check_branch
      %1766 = sbr.rel (0) target = $region49
    $region48: #{mhatt_forward.1} parent=1 // pred_region
      _
    $region49: #{mhatt_forward.1} parent=1 // pred_fallthru
      _
    // Predicated region
    $region50: #{mhatt_forward.1} parent=1 // pred_check
      _
    $region51: #{mhatt_forward.1} parent=1 // pred_check_branch
      %1768 = sbr.rel (0) target = $region53
    $region52: #{mhatt_forward.1} parent=1 // pred_region
      %1769 = dma.done [#allocation4], 256
    $region53: #{mhatt_forward.1} parent=1 // pred_fallthru
      _
    // Predicated region
    $region54: #{mhatt_forward.1} parent=1 // pred_check
      _
    $region55: #{mhatt_forward.1} parent=1 // pred_check_branch
      %1771 = sbr.rel (0) target = $region57
    $region56: #{mhatt_forward.1} parent=1 // pred_region
      _
    $region57: #{mhatt_forward.1} parent=1 // pred_fallthru
      _
    %1772 = vsyncpa [#allocation3], 1
    %1773 = vsyncpa [#allocation6], 1
    %1774 = vsyncpa [#allocation9], 1
    %1775 = vsyncpa [#allocation4], 1

</llo_original>
